<compile_context>
chip_gen: v5e
topology: v5e:2x2
jax: 0.10.0
libtpu: 0.0.40
codegen_flags: <defaults>
</compile_context>

<pallas_src>
import functools

import jax
import jax.numpy as jnp
from jax.experimental import pallas as pl
from jax.experimental.pallas import tpu as pltpu


def _resnet_block_kernel(x_ref, w1_ref, w2_ref, o_ref, *, C, H, W, NB, use_mxu):
    # x_ref / o_ref : (NB, C, H*W) VMEM tiles (lane axis = flattened spatial)
    # w1_ref/w2_ref : (9, C_out, C_in) VMEM conv weights, tap index t = ky*3 + kx
    HW = H * W
    eps = 1e-5

    # Flattened-lane index s = h*W + w and the reflect-boundary masks (built once).
    s = jax.lax.broadcasted_iota(jnp.int32, (C, HW), dimension=1)
    col = s % W
    is_col0 = col == 0            # w == 0
    is_colW = col == W - 1        # w == W-1
    is_row0 = s < W               # h == 0
    is_rowH = s >= (H - 1) * W    # h == H-1

    def shift(a, k):
        # out[..., p] = a[..., (p + k) % HW]; wrapped entries are masked by the caller.
        # (Lane rotate; pltpu.roll would be the dedicated XLU form of the same thing.)
        k = k % HW
        if k == 0:
            return a
        return jnp.concatenate([a[..., k:], a[..., :k]], axis=-1)

    def contract(w_t, tap):
        # out[co, s] = sum_ci w_t[co, ci] * tap[ci, s]
        if use_mxu:
            # im2col-style tap matmul on the MXU, f32 accumulation.
            return jnp.dot(w_t, tap, preferred_element_type=jnp.float32)
        # Tiny-C path: exact f32 VPU broadcast accumulation (MXU would be ~all padding).
        out = w_t[:, 0:1] * tap[0:1, :]
        for ci in range(1, C):
            out = out + w_t[:, ci:ci + 1] * tap[ci:ci + 1, :]
        return out

    def conv3x3(x, w_ref):
        # x: (C, HW).  Build column-reflected taps once, then row-shift them.
        xl = shift(x, +1)                      # value at w+1
        xr = shift(x, -1)                      # value at w-1
        cols = (jnp.where(is_col0, xl, xr),    # dx = -1  (reflect at w==0)
                x,                             # dx =  0
                jnp.where(is_colW, xr, xl))    # dx = +1  (reflect at w==W-1)
        acc = jnp.zeros((C, HW), jnp.float32)
        for dxi, c in enumerate(cols):
            up = shift(c, -W)                  # row h-1
            dn = shift(c, +W)                  # row h+1
            rows = (jnp.where(is_row0, dn, up),    # dy = -1 (reflect at h==0)
                    c,                             # dy =  0
                    jnp.where(is_rowH, up, dn))    # dy = +1 (reflect at h==H-1)
            for dyi, tap in enumerate(rows):
                acc = acc + contract(w_ref[dyi * 3 + dxi], tap)
        return acc

    def instance_norm(y):
        # Per-channel stats batched over C in one lane-reduce each; reuse centered slab.
        m = jnp.mean(y, axis=-1, keepdims=True)
        yc = y - m
        v = jnp.mean(yc * yc, axis=-1, keepdims=True)   # biased variance (PyTorch IN)
        return yc * jax.lax.rsqrt(v + eps)

    for n in range(NB):
        x = x_ref[n]                                           # (C, HW)
        h = jnp.maximum(instance_norm(conv3x3(x, w1_ref)), 0.0)  # ReLU
        h = instance_norm(conv3x3(h, w2_ref))
        # Residual add + one lane-dense whole-tile store per image.
        o_ref[n] = (x_ref[n] + h).astype(o_ref.dtype)


def resnet_block(x, w1, w2, *, block_n=None):
    """x: (N, C, H, W) f32; w1, w2: (C, C, 3, 3) f32 conv weights (OIHW)."""
    N, C, H, W = x.shape
    assert H >= 3 and W >= 3, "reflect pad of 1 needs H, W >= 3"
    HW = H * W

    # Lane-dense flattened-spatial layout.
    xf = x.reshape(N, C, HW).astype(jnp.float32)
    # OIHW -> (ky, kx, C_out, C_in) -> (9, C_out, C_in) VMEM weight tiles.
    wt1 = jnp.transpose(w1.astype(jnp.float32), (2, 3, 0, 1)).reshape(9, C, C)
    wt2 = jnp.transpose(w2.astype(jnp.float32), (2, 3, 0, 1)).reshape(9, C, C)

    if block_n is None:
        # Amortize per-grid-step overhead over several images while keeping the grid
        # length >= 2 (megacore / v7x dual-TC parallelism along the batch axis).
        block_n = 1
        for cand in (8, 4, 2):
            if N % cand == 0 and N // cand >= 2:
                block_n = cand
                break
    assert N % block_n == 0
    grid = (N // block_n,)

    use_mxu = C >= 16   # MXU tap-matmul for realistic channel counts; VPU for tiny C.

    kernel = functools.partial(_resnet_block_kernel, C=C, H=H, W=W,
                               NB=block_n, use_mxu=use_mxu)

    out = pl.pallas_call(
        kernel,
        out_shape=jax.ShapeDtypeStruct((N, C, HW), jnp.float32),
        grid_spec=pltpu.PrefetchScalarGridSpec(
            num_scalar_prefetch=0,
            grid=grid,
            in_specs=[
                pl.BlockSpec((block_n, C, HW), lambda n: (n, 0, 0)),
                pl.BlockSpec((9, C, C), lambda n: (0, 0, 0)),
                pl.BlockSpec((9, C, C), lambda n: (0, 0, 0)),
            ],
            out_specs=pl.BlockSpec((block_n, C, HW), lambda n: (n, 0, 0)),
        ),
        compiler_params=pltpu.CompilerParams(
            dimension_semantics=("parallel",)),
    )(xf, wt1, wt2)
    return out.reshape(N, C, H, W)


def resnet_block_ref(x, w1, w2):
    """Pure-JAX reference matching the PyTorch module."""
    def pad_reflect(a):
        return jnp.pad(a, ((0, 0), (0, 0), (1, 1), (1, 1)), mode='reflect')

    def conv(a, w):
        return jax.lax.conv_general_dilated(
            a, w, window_strides=(1, 1), padding='VALID',
            dimension_numbers=('NCHW', 'OIHW', 'NCHW'),
            precision=jax.lax.Precision.HIGHEST)

    def inorm(y):
        m = y.mean(axis=(2, 3), keepdims=True)
        v = ((y - m) ** 2).mean(axis=(2, 3), keepdims=True)
        return (y - m) / jnp.sqrt(v + 1e-5)

    h = jnp.maximum(inorm(conv(pad_reflect(x), w1)), 0.0)
    h = inorm(conv(pad_reflect(h), w2))
    return x + h


if __name__ == "__main__":
    N, C, H, W = 2, 4, 16, 16
    key = jax.random.PRNGKey(0)
    kx, k1, k2 = jax.random.split(key, 3)

    x = jax.random.normal(kx, (N, C, H, W), dtype=jnp.float32)
    # Deterministic synthetic conv weights (shapes from nn.Conv2d(dim, dim, 3, bias=False))
    w1 = jax.random.normal(k1, (C, C, 3, 3), dtype=jnp.float32) * 0.1
    w2 = jax.random.normal(k2, (C, C, 3, 3), dtype=jnp.float32) * 0.1

    out = resnet_block(x, w1, w2)
    out = jax.block_until_ready(out)

    ref = resnet_block_ref(x, w1, w2)
    assert out.shape == (N, C, H, W)
    assert jnp.allclose(out, ref, rtol=1e-4, atol=5e-4), "mismatch vs JAX reference"

    print("KERNEL_OK")
</pallas_src>

<mosaic_0001>
module attributes {stable_mosaic.version = 11 : i64} {
  func.func @_resnet_block_kernel(%arg0: i32, %arg1: memref<1x4x256xf32, #tpu.memory_space<vmem>>, %arg2: memref<9x4x4xf32, #tpu.memory_space<vmem>>, %arg3: memref<9x4x4xf32, #tpu.memory_space<vmem>>, %arg4: memref<1x4x256xf32, #tpu.memory_space<vmem>>) attributes {dimension_semantics = [#tpu.dimension_semantics<parallel>], iteration_bounds = array<i64: 2>, scalar_prefetch = 0 : i64, scratch_operands = 0 : i64, tpu.core_type = #tpu.core_type<tc>, window_params = [{transform_indices = @transform_0, window_bounds = array<i64: 1, 4, 256>}, {pipeline_mode = #tpu.pipeline_mode<synchronous>, transform_indices = @transform_1, window_bounds = array<i64: 9, 4, 4>}, {pipeline_mode = #tpu.pipeline_mode<synchronous>, transform_indices = @transform_2, window_bounds = array<i64: 9, 4, 4>}, {transform_indices = @transform_3, window_bounds = array<i64: 1, 4, 256>}]} {
    %0 = tpu.iota {dimensions = array<i32: 1>} : vector<4x256xi32>
    %c16_i32 = arith.constant 16 : i32
    %c0_i32 = arith.constant 0 : i32
    %1 = arith.cmpi eq, %c16_i32, %c0_i32 : i32
    %c1_i32 = arith.constant 1 : i32
    %2 = arith.select %1, %c1_i32, %c16_i32 : i32
    %3 = vector.broadcast %2 : i32 to vector<4x256xi32>
    %4 = arith.remsi %0, %3 : vector<4x256xi32>
    %c0_i32_0 = arith.constant 0 : i32
    %5 = vector.broadcast %c0_i32_0 : i32 to vector<4x256xi32>
    %6 = arith.cmpi ne, %4, %5 : vector<4x256xi32>
    %c0_i32_1 = arith.constant 0 : i32
    %7 = vector.broadcast %c0_i32_1 : i32 to vector<4x256xi32>
    %8 = arith.cmpi slt, %4, %7 : vector<4x256xi32>
    %c0_i32_2 = arith.constant 0 : i32
    %9 = arith.cmpi slt, %2, %c0_i32_2 : i32
    %10 = vector.broadcast %9 : i1 to vector<4x256xi1>
    %11 = vector.broadcast %10 : vector<4x256xi1> to vector<4x256xi1>
    %12 = arith.xori %8, %11 : vector<4x256xi1>
    %13 = arith.andi %12, %6 : vector<4x256xi1>
    %14 = vector.broadcast %2 : i32 to vector<4x256xi32>
    %15 = arith.addi %4, %14 : vector<4x256xi32>
    %16 = arith.select %13, %15, %4 : vector<4x256xi1>, vector<4x256xi32>
    %c0_i32_3 = arith.constant 0 : i32
    %17 = vector.broadcast %c0_i32_3 : i32 to vector<4x256xi32>
    %18 = arith.cmpi eq, %16, %17 : vector<4x256xi32>
    %c15_i32 = arith.constant 15 : i32
    %19 = vector.broadcast %c15_i32 : i32 to vector<4x256xi32>
    %20 = arith.cmpi eq, %16, %19 : vector<4x256xi32>
    %c16_i32_4 = arith.constant 16 : i32
    %21 = vector.broadcast %c16_i32_4 : i32 to vector<4x256xi32>
    %22 = arith.cmpi slt, %0, %21 : vector<4x256xi32>
    %c240_i32 = arith.constant 240 : i32
    %23 = vector.broadcast %c240_i32 : i32 to vector<4x256xi32>
    %24 = arith.cmpi sge, %0, %23 : vector<4x256xi32>
    %c0 = arith.constant 0 : index
    %c0_5 = arith.constant 0 : index
    %c0_6 = arith.constant 0 : index
    %25 = vector.load %arg1[%c0, %c0_5, %c0_6] : memref<1x4x256xf32, #tpu.memory_space<vmem>>, vector<1x4x256xf32>
    %26 = vector.shape_cast %25 : vector<1x4x256xf32> to vector<4x256xf32>
    %27 = vector.extract_strided_slice %26 {offsets = [0, 1], sizes = [4, 255], strides = [1, 1]} : vector<4x256xf32> to vector<4x255xf32>
    %28 = vector.extract_strided_slice %26 {offsets = [0, 0], sizes = [4, 1], strides = [1, 1]} : vector<4x256xf32> to vector<4x1xf32>
    %29 = tpu.concatenate %27, %28 in 1 : vector<4x255xf32>, vector<4x1xf32> -> vector<4x256xf32>
    %30 = vector.extract_strided_slice %26 {offsets = [0, 255], sizes = [4, 1], strides = [1, 1]} : vector<4x256xf32> to vector<4x1xf32>
    %31 = vector.extract_strided_slice %26 {offsets = [0, 0], sizes = [4, 255], strides = [1, 1]} : vector<4x256xf32> to vector<4x255xf32>
    %32 = tpu.concatenate %30, %31 in 1 : vector<4x1xf32>, vector<4x255xf32> -> vector<4x256xf32>
    %33 = arith.select %18, %29, %32 : vector<4x256xi1>, vector<4x256xf32>
    %34 = arith.select %20, %32, %29 : vector<4x256xi1>, vector<4x256xf32>
    %cst = arith.constant 0.000000e+00 : f32
    %35 = vector.broadcast %cst : f32 to vector<4x256xf32>
    %36 = vector.extract_strided_slice %33 {offsets = [0, 240], sizes = [4, 16], strides = [1, 1]} : vector<4x256xf32> to vector<4x16xf32>
    %37 = vector.extract_strided_slice %33 {offsets = [0, 0], sizes = [4, 240], strides = [1, 1]} : vector<4x256xf32> to vector<4x240xf32>
    %38 = tpu.concatenate %36, %37 in 1 : vector<4x16xf32>, vector<4x240xf32> -> vector<4x256xf32>
    %39 = vector.extract_strided_slice %33 {offsets = [0, 16], sizes = [4, 240], strides = [1, 1]} : vector<4x256xf32> to vector<4x240xf32>
    %40 = vector.extract_strided_slice %33 {offsets = [0, 0], sizes = [4, 16], strides = [1, 1]} : vector<4x256xf32> to vector<4x16xf32>
    %41 = tpu.concatenate %39, %40 in 1 : vector<4x240xf32>, vector<4x16xf32> -> vector<4x256xf32>
    %42 = arith.select %22, %41, %38 : vector<4x256xi1>, vector<4x256xf32>
    %43 = arith.select %24, %38, %41 : vector<4x256xi1>, vector<4x256xf32>
    %c0_7 = arith.constant 0 : index
    %c0_8 = arith.constant 0 : index
    %c0_9 = arith.constant 0 : index
    %44 = vector.load %arg2[%c0_7, %c0_8, %c0_9] : memref<9x4x4xf32, #tpu.memory_space<vmem>>, vector<1x4x4xf32>
    %45 = vector.shape_cast %44 : vector<1x4x4xf32> to vector<4x4xf32>
    %46 = vector.extract_strided_slice %45 {offsets = [0, 0], sizes = [4, 1], strides = [1, 1]} : vector<4x4xf32> to vector<4x1xf32>
    %47 = vector.extract_strided_slice %42 {offsets = [0, 0], sizes = [1, 256], strides = [1, 1]} : vector<4x256xf32> to vector<1x256xf32>
    %48 = vector.broadcast %46 : vector<4x1xf32> to vector<4x256xf32>
    %49 = vector.broadcast %47 : vector<1x256xf32> to vector<4x256xf32>
    %50 = arith.mulf %48, %49 : vector<4x256xf32>
    %51 = vector.extract_strided_slice %45 {offsets = [0, 1], sizes = [4, 1], strides = [1, 1]} : vector<4x4xf32> to vector<4x1xf32>
    %52 = vector.extract_strided_slice %42 {offsets = [1, 0], sizes = [1, 256], strides = [1, 1]} : vector<4x256xf32> to vector<1x256xf32>
    %53 = vector.broadcast %51 : vector<4x1xf32> to vector<4x256xf32>
    %54 = vector.broadcast %52 : vector<1x256xf32> to vector<4x256xf32>
    %55 = arith.mulf %53, %54 : vector<4x256xf32>
    %56 = arith.addf %50, %55 : vector<4x256xf32>
    %57 = vector.extract_strided_slice %45 {offsets = [0, 2], sizes = [4, 1], strides = [1, 1]} : vector<4x4xf32> to vector<4x1xf32>
    %58 = vector.extract_strided_slice %42 {offsets = [2, 0], sizes = [1, 256], strides = [1, 1]} : vector<4x256xf32> to vector<1x256xf32>
    %59 = vector.broadcast %57 : vector<4x1xf32> to vector<4x256xf32>
    %60 = vector.broadcast %58 : vector<1x256xf32> to vector<4x256xf32>
    %61 = arith.mulf %59, %60 : vector<4x256xf32>
    %62 = arith.addf %56, %61 : vector<4x256xf32>
    %63 = vector.extract_strided_slice %45 {offsets = [0, 3], sizes = [4, 1], strides = [1, 1]} : vector<4x4xf32> to vector<4x1xf32>
    %64 = vector.extract_strided_slice %42 {offsets = [3, 0], sizes = [1, 256], strides = [1, 1]} : vector<4x256xf32> to vector<1x256xf32>
    %65 = vector.broadcast %63 : vector<4x1xf32> to vector<4x256xf32>
    %66 = vector.broadcast %64 : vector<1x256xf32> to vector<4x256xf32>
    %67 = arith.mulf %65, %66 : vector<4x256xf32>
    %68 = arith.addf %62, %67 : vector<4x256xf32>
    %69 = arith.addf %35, %68 : vector<4x256xf32>
    %c3 = arith.constant 3 : index
    %c0_10 = arith.constant 0 : index
    %c0_11 = arith.constant 0 : index
    %70 = vector.load %arg2[%c3, %c0_10, %c0_11] : memref<9x4x4xf32, #tpu.memory_space<vmem>>, vector<1x4x4xf32>
    %71 = vector.shape_cast %70 : vector<1x4x4xf32> to vector<4x4xf32>
    %72 = vector.extract_strided_slice %71 {offsets = [0, 0], sizes = [4, 1], strides = [1, 1]} : vector<4x4xf32> to vector<4x1xf32>
    %73 = vector.extract_strided_slice %33 {offsets = [0, 0], sizes = [1, 256], strides = [1, 1]} : vector<4x256xf32> to vector<1x256xf32>
    %74 = vector.broadcast %72 : vector<4x1xf32> to vector<4x256xf32>
    %75 = vector.broadcast %73 : vector<1x256xf32> to vector<4x256xf32>
    %76 = arith.mulf %74, %75 : vector<4x256xf32>
    %77 = vector.extract_strided_slice %71 {offsets = [0, 1], sizes = [4, 1], strides = [1, 1]} : vector<4x4xf32> to vector<4x1xf32>
    %78 = vector.extract_strided_slice %33 {offsets = [1, 0], sizes = [1, 256], strides = [1, 1]} : vector<4x256xf32> to vector<1x256xf32>
    %79 = vector.broadcast %77 : vector<4x1xf32> to vector<4x256xf32>
    %80 = vector.broadcast %78 : vector<1x256xf32> to vector<4x256xf32>
    %81 = arith.mulf %79, %80 : vector<4x256xf32>
    %82 = arith.addf %76, %81 : vector<4x256xf32>
    %83 = vector.extract_strided_slice %71 {offsets = [0, 2], sizes = [4, 1], strides = [1, 1]} : vector<4x4xf32> to vector<4x1xf32>
    %84 = vector.extract_strided_slice %33 {offsets = [2, 0], sizes = [1, 256], strides = [1, 1]} : vector<4x256xf32> to vector<1x256xf32>
    %85 = vector.broadcast %83 : vector<4x1xf32> to vector<4x256xf32>
    %86 = vector.broadcast %84 : vector<1x256xf32> to vector<4x256xf32>
    %87 = arith.mulf %85, %86 : vector<4x256xf32>
    %88 = arith.addf %82, %87 : vector<4x256xf32>
    %89 = vector.extract_strided_slice %71 {offsets = [0, 3], sizes = [4, 1], strides = [1, 1]} : vector<4x4xf32> to vector<4x1xf32>
    %90 = vector.extract_strided_slice %33 {offsets = [3, 0], sizes = [1, 256], strides = [1, 1]} : vector<4x256xf32> to vector<1x256xf32>
    %91 = vector.broadcast %89 : vector<4x1xf32> to vector<4x256xf32>
    %92 = vector.broadcast %90 : vector<1x256xf32> to vector<4x256xf32>
    %93 = arith.mulf %91, %92 : vector<4x256xf32>
    %94 = arith.addf %88, %93 : vector<4x256xf32>
    %95 = arith.addf %69, %94 : vector<4x256xf32>
    %c6 = arith.constant 6 : index
    %c0_12 = arith.constant 0 : index
    %c0_13 = arith.constant 0 : index
    %96 = vector.load %arg2[%c6, %c0_12, %c0_13] : memref<9x4x4xf32, #tpu.memory_space<vmem>>, vector<1x4x4xf32>
    %97 = vector.shape_cast %96 : vector<1x4x4xf32> to vector<4x4xf32>
    %98 = vector.extract_strided_slice %97 {offsets = [0, 0], sizes = [4, 1], strides = [1, 1]} : vector<4x4xf32> to vector<4x1xf32>
    %99 = vector.extract_strided_slice %43 {offsets = [0, 0], sizes = [1, 256], strides = [1, 1]} : vector<4x256xf32> to vector<1x256xf32>
    %100 = vector.broadcast %98 : vector<4x1xf32> to vector<4x256xf32>
    %101 = vector.broadcast %99 : vector<1x256xf32> to vector<4x256xf32>
    %102 = arith.mulf %100, %101 : vector<4x256xf32>
    %103 = vector.extract_strided_slice %97 {offsets = [0, 1], sizes = [4, 1], strides = [1, 1]} : vector<4x4xf32> to vector<4x1xf32>
    %104 = vector.extract_strided_slice %43 {offsets = [1, 0], sizes = [1, 256], strides = [1, 1]} : vector<4x256xf32> to vector<1x256xf32>
    %105 = vector.broadcast %103 : vector<4x1xf32> to vector<4x256xf32>
    %106 = vector.broadcast %104 : vector<1x256xf32> to vector<4x256xf32>
    %107 = arith.mulf %105, %106 : vector<4x256xf32>
    %108 = arith.addf %102, %107 : vector<4x256xf32>
    %109 = vector.extract_strided_slice %97 {offsets = [0, 2], sizes = [4, 1], strides = [1, 1]} : vector<4x4xf32> to vector<4x1xf32>
    %110 = vector.extract_strided_slice %43 {offsets = [2, 0], sizes = [1, 256], strides = [1, 1]} : vector<4x256xf32> to vector<1x256xf32>
    %111 = vector.broadcast %109 : vector<4x1xf32> to vector<4x256xf32>
    %112 = vector.broadcast %110 : vector<1x256xf32> to vector<4x256xf32>
    %113 = arith.mulf %111, %112 : vector<4x256xf32>
    %114 = arith.addf %108, %113 : vector<4x256xf32>
    %115 = vector.extract_strided_slice %97 {offsets = [0, 3], sizes = [4, 1], strides = [1, 1]} : vector<4x4xf32> to vector<4x1xf32>
    %116 = vector.extract_strided_slice %43 {offsets = [3, 0], sizes = [1, 256], strides = [1, 1]} : vector<4x256xf32> to vector<1x256xf32>
    %117 = vector.broadcast %115 : vector<4x1xf32> to vector<4x256xf32>
    %118 = vector.broadcast %116 : vector<1x256xf32> to vector<4x256xf32>
    %119 = arith.mulf %117, %118 : vector<4x256xf32>
    %120 = arith.addf %114, %119 : vector<4x256xf32>
    %121 = arith.addf %95, %120 : vector<4x256xf32>
    %122 = vector.extract_strided_slice %26 {offsets = [0, 240], sizes = [4, 16], strides = [1, 1]} : vector<4x256xf32> to vector<4x16xf32>
    %123 = vector.extract_strided_slice %26 {offsets = [0, 0], sizes = [4, 240], strides = [1, 1]} : vector<4x256xf32> to vector<4x240xf32>
    %124 = tpu.concatenate %122, %123 in 1 : vector<4x16xf32>, vector<4x240xf32> -> vector<4x256xf32>
    %125 = vector.extract_strided_slice %26 {offsets = [0, 16], sizes = [4, 240], strides = [1, 1]} : vector<4x256xf32> to vector<4x240xf32>
    %126 = vector.extract_strided_slice %26 {offsets = [0, 0], sizes = [4, 16], strides = [1, 1]} : vector<4x256xf32> to vector<4x16xf32>
    %127 = tpu.concatenate %125, %126 in 1 : vector<4x240xf32>, vector<4x16xf32> -> vector<4x256xf32>
    %128 = arith.select %22, %127, %124 : vector<4x256xi1>, vector<4x256xf32>
    %129 = arith.select %24, %124, %127 : vector<4x256xi1>, vector<4x256xf32>
    %c1 = arith.constant 1 : index
    %c0_14 = arith.constant 0 : index
    %c0_15 = arith.constant 0 : index
    %130 = vector.load %arg2[%c1, %c0_14, %c0_15] : memref<9x4x4xf32, #tpu.memory_space<vmem>>, vector<1x4x4xf32>
    %131 = vector.shape_cast %130 : vector<1x4x4xf32> to vector<4x4xf32>
    %132 = vector.extract_strided_slice %131 {offsets = [0, 0], sizes = [4, 1], strides = [1, 1]} : vector<4x4xf32> to vector<4x1xf32>
    %133 = vector.extract_strided_slice %128 {offsets = [0, 0], sizes = [1, 256], strides = [1, 1]} : vector<4x256xf32> to vector<1x256xf32>
    %134 = vector.broadcast %132 : vector<4x1xf32> to vector<4x256xf32>
    %135 = vector.broadcast %133 : vector<1x256xf32> to vector<4x256xf32>
    %136 = arith.mulf %134, %135 : vector<4x256xf32>
    %137 = vector.extract_strided_slice %131 {offsets = [0, 1], sizes = [4, 1], strides = [1, 1]} : vector<4x4xf32> to vector<4x1xf32>
    %138 = vector.extract_strided_slice %128 {offsets = [1, 0], sizes = [1, 256], strides = [1, 1]} : vector<4x256xf32> to vector<1x256xf32>
    %139 = vector.broadcast %137 : vector<4x1xf32> to vector<4x256xf32>
    %140 = vector.broadcast %138 : vector<1x256xf32> to vector<4x256xf32>
    %141 = arith.mulf %139, %140 : vector<4x256xf32>
    %142 = arith.addf %136, %141 : vector<4x256xf32>
    %143 = vector.extract_strided_slice %131 {offsets = [0, 2], sizes = [4, 1], strides = [1, 1]} : vector<4x4xf32> to vector<4x1xf32>
    %144 = vector.extract_strided_slice %128 {offsets = [2, 0], sizes = [1, 256], strides = [1, 1]} : vector<4x256xf32> to vector<1x256xf32>
    %145 = vector.broadcast %143 : vector<4x1xf32> to vector<4x256xf32>
    %146 = vector.broadcast %144 : vector<1x256xf32> to vector<4x256xf32>
    %147 = arith.mulf %145, %146 : vector<4x256xf32>
    %148 = arith.addf %142, %147 : vector<4x256xf32>
    %149 = vector.extract_strided_slice %131 {offsets = [0, 3], sizes = [4, 1], strides = [1, 1]} : vector<4x4xf32> to vector<4x1xf32>
    %150 = vector.extract_strided_slice %128 {offsets = [3, 0], sizes = [1, 256], strides = [1, 1]} : vector<4x256xf32> to vector<1x256xf32>
    %151 = vector.broadcast %149 : vector<4x1xf32> to vector<4x256xf32>
    %152 = vector.broadcast %150 : vector<1x256xf32> to vector<4x256xf32>
    %153 = arith.mulf %151, %152 : vector<4x256xf32>
    %154 = arith.addf %148, %153 : vector<4x256xf32>
    %155 = arith.addf %121, %154 : vector<4x256xf32>
    %c4 = arith.constant 4 : index
    %c0_16 = arith.constant 0 : index
    %c0_17 = arith.constant 0 : index
    %156 = vector.load %arg2[%c4, %c0_16, %c0_17] : memref<9x4x4xf32, #tpu.memory_space<vmem>>, vector<1x4x4xf32>
    %157 = vector.shape_cast %156 : vector<1x4x4xf32> to vector<4x4xf32>
    %158 = vector.extract_strided_slice %157 {offsets = [0, 0], sizes = [4, 1], strides = [1, 1]} : vector<4x4xf32> to vector<4x1xf32>
    %159 = vector.extract_strided_slice %26 {offsets = [0, 0], sizes = [1, 256], strides = [1, 1]} : vector<4x256xf32> to vector<1x256xf32>
    %160 = vector.broadcast %158 : vector<4x1xf32> to vector<4x256xf32>
    %161 = vector.broadcast %159 : vector<1x256xf32> to vector<4x256xf32>
    %162 = arith.mulf %160, %161 : vector<4x256xf32>
    %163 = vector.extract_strided_slice %157 {offsets = [0, 1], sizes = [4, 1], strides = [1, 1]} : vector<4x4xf32> to vector<4x1xf32>
    %164 = vector.extract_strided_slice %26 {offsets = [1, 0], sizes = [1, 256], strides = [1, 1]} : vector<4x256xf32> to vector<1x256xf32>
    %165 = vector.broadcast %163 : vector<4x1xf32> to vector<4x256xf32>
    %166 = vector.broadcast %164 : vector<1x256xf32> to vector<4x256xf32>
    %167 = arith.mulf %165, %166 : vector<4x256xf32>
    %168 = arith.addf %162, %167 : vector<4x256xf32>
    %169 = vector.extract_strided_slice %157 {offsets = [0, 2], sizes = [4, 1], strides = [1, 1]} : vector<4x4xf32> to vector<4x1xf32>
    %170 = vector.extract_strided_slice %26 {offsets = [2, 0], sizes = [1, 256], strides = [1, 1]} : vector<4x256xf32> to vector<1x256xf32>
    %171 = vector.broadcast %169 : vector<4x1xf32> to vector<4x256xf32>
    %172 = vector.broadcast %170 : vector<1x256xf32> to vector<4x256xf32>
    %173 = arith.mulf %171, %172 : vector<4x256xf32>
    %174 = arith.addf %168, %173 : vector<4x256xf32>
    %175 = vector.extract_strided_slice %157 {offsets = [0, 3], sizes = [4, 1], strides = [1, 1]} : vector<4x4xf32> to vector<4x1xf32>
    %176 = vector.extract_strided_slice %26 {offsets = [3, 0], sizes = [1, 256], strides = [1, 1]} : vector<4x256xf32> to vector<1x256xf32>
    %177 = vector.broadcast %175 : vector<4x1xf32> to vector<4x256xf32>
    %178 = vector.broadcast %176 : vector<1x256xf32> to vector<4x256xf32>
    %179 = arith.mulf %177, %178 : vector<4x256xf32>
    %180 = arith.addf %174, %179 : vector<4x256xf32>
    %181 = arith.addf %155, %180 : vector<4x256xf32>
    %c7 = arith.constant 7 : index
    %c0_18 = arith.constant 0 : index
    %c0_19 = arith.constant 0 : index
    %182 = vector.load %arg2[%c7, %c0_18, %c0_19] : memref<9x4x4xf32, #tpu.memory_space<vmem>>, vector<1x4x4xf32>
    %183 = vector.shape_cast %182 : vector<1x4x4xf32> to vector<4x4xf32>
    %184 = vector.extract_strided_slice %183 {offsets = [0, 0], sizes = [4, 1], strides = [1, 1]} : vector<4x4xf32> to vector<4x1xf32>
    %185 = vector.extract_strided_slice %129 {offsets = [0, 0], sizes = [1, 256], strides = [1, 1]} : vector<4x256xf32> to vector<1x256xf32>
    %186 = vector.broadcast %184 : vector<4x1xf32> to vector<4x256xf32>
    %187 = vector.broadcast %185 : vector<1x256xf32> to vector<4x256xf32>
    %188 = arith.mulf %186, %187 : vector<4x256xf32>
    %189 = vector.extract_strided_slice %183 {offsets = [0, 1], sizes = [4, 1], strides = [1, 1]} : vector<4x4xf32> to vector<4x1xf32>
    %190 = vector.extract_strided_slice %129 {offsets = [1, 0], sizes = [1, 256], strides = [1, 1]} : vector<4x256xf32> to vector<1x256xf32>
    %191 = vector.broadcast %189 : vector<4x1xf32> to vector<4x256xf32>
    %192 = vector.broadcast %190 : vector<1x256xf32> to vector<4x256xf32>
    %193 = arith.mulf %191, %192 : vector<4x256xf32>
    %194 = arith.addf %188, %193 : vector<4x256xf32>
    %195 = vector.extract_strided_slice %183 {offsets = [0, 2], sizes = [4, 1], strides = [1, 1]} : vector<4x4xf32> to vector<4x1xf32>
    %196 = vector.extract_strided_slice %129 {offsets = [2, 0], sizes = [1, 256], strides = [1, 1]} : vector<4x256xf32> to vector<1x256xf32>
    %197 = vector.broadcast %195 : vector<4x1xf32> to vector<4x256xf32>
    %198 = vector.broadcast %196 : vector<1x256xf32> to vector<4x256xf32>
    %199 = arith.mulf %197, %198 : vector<4x256xf32>
    %200 = arith.addf %194, %199 : vector<4x256xf32>
    %201 = vector.extract_strided_slice %183 {offsets = [0, 3], sizes = [4, 1], strides = [1, 1]} : vector<4x4xf32> to vector<4x1xf32>
    %202 = vector.extract_strided_slice %129 {offsets = [3, 0], sizes = [1, 256], strides = [1, 1]} : vector<4x256xf32> to vector<1x256xf32>
    %203 = vector.broadcast %201 : vector<4x1xf32> to vector<4x256xf32>
    %204 = vector.broadcast %202 : vector<1x256xf32> to vector<4x256xf32>
    %205 = arith.mulf %203, %204 : vector<4x256xf32>
    %206 = arith.addf %200, %205 : vector<4x256xf32>
    %207 = arith.addf %181, %206 : vector<4x256xf32>
    %208 = vector.extract_strided_slice %34 {offsets = [0, 240], sizes = [4, 16], strides = [1, 1]} : vector<4x256xf32> to vector<4x16xf32>
    %209 = vector.extract_strided_slice %34 {offsets = [0, 0], sizes = [4, 240], strides = [1, 1]} : vector<4x256xf32> to vector<4x240xf32>
    %210 = tpu.concatenate %208, %209 in 1 : vector<4x16xf32>, vector<4x240xf32> -> vector<4x256xf32>
    %211 = vector.extract_strided_slice %34 {offsets = [0, 16], sizes = [4, 240], strides = [1, 1]} : vector<4x256xf32> to vector<4x240xf32>
    %212 = vector.extract_strided_slice %34 {offsets = [0, 0], sizes = [4, 16], strides = [1, 1]} : vector<4x256xf32> to vector<4x16xf32>
    %213 = tpu.concatenate %211, %212 in 1 : vector<4x240xf32>, vector<4x16xf32> -> vector<4x256xf32>
    %214 = arith.select %22, %213, %210 : vector<4x256xi1>, vector<4x256xf32>
    %215 = arith.select %24, %210, %213 : vector<4x256xi1>, vector<4x256xf32>
    %c2 = arith.constant 2 : index
    %c0_20 = arith.constant 0 : index
    %c0_21 = arith.constant 0 : index
    %216 = vector.load %arg2[%c2, %c0_20, %c0_21] : memref<9x4x4xf32, #tpu.memory_space<vmem>>, vector<1x4x4xf32>
    %217 = vector.shape_cast %216 : vector<1x4x4xf32> to vector<4x4xf32>
    %218 = vector.extract_strided_slice %217 {offsets = [0, 0], sizes = [4, 1], strides = [1, 1]} : vector<4x4xf32> to vector<4x1xf32>
    %219 = vector.extract_strided_slice %214 {offsets = [0, 0], sizes = [1, 256], strides = [1, 1]} : vector<4x256xf32> to vector<1x256xf32>
    %220 = vector.broadcast %218 : vector<4x1xf32> to vector<4x256xf32>
    %221 = vector.broadcast %219 : vector<1x256xf32> to vector<4x256xf32>
    %222 = arith.mulf %220, %221 : vector<4x256xf32>
    %223 = vector.extract_strided_slice %217 {offsets = [0, 1], sizes = [4, 1], strides = [1, 1]} : vector<4x4xf32> to vector<4x1xf32>
    %224 = vector.extract_strided_slice %214 {offsets = [1, 0], sizes = [1, 256], strides = [1, 1]} : vector<4x256xf32> to vector<1x256xf32>
    %225 = vector.broadcast %223 : vector<4x1xf32> to vector<4x256xf32>
    %226 = vector.broadcast %224 : vector<1x256xf32> to vector<4x256xf32>
    %227 = arith.mulf %225, %226 : vector<4x256xf32>
    %228 = arith.addf %222, %227 : vector<4x256xf32>
    %229 = vector.extract_strided_slice %217 {offsets = [0, 2], sizes = [4, 1], strides = [1, 1]} : vector<4x4xf32> to vector<4x1xf32>
    %230 = vector.extract_strided_slice %214 {offsets = [2, 0], sizes = [1, 256], strides = [1, 1]} : vector<4x256xf32> to vector<1x256xf32>
    %231 = vector.broadcast %229 : vector<4x1xf32> to vector<4x256xf32>
    %232 = vector.broadcast %230 : vector<1x256xf32> to vector<4x256xf32>
    %233 = arith.mulf %231, %232 : vector<4x256xf32>
    %234 = arith.addf %228, %233 : vector<4x256xf32>
    %235 = vector.extract_strided_slice %217 {offsets = [0, 3], sizes = [4, 1], strides = [1, 1]} : vector<4x4xf32> to vector<4x1xf32>
    %236 = vector.extract_strided_slice %214 {offsets = [3, 0], sizes = [1, 256], strides = [1, 1]} : vector<4x256xf32> to vector<1x256xf32>
    %237 = vector.broadcast %235 : vector<4x1xf32> to vector<4x256xf32>
    %238 = vector.broadcast %236 : vector<1x256xf32> to vector<4x256xf32>
    %239 = arith.mulf %237, %238 : vector<4x256xf32>
    %240 = arith.addf %234, %239 : vector<4x256xf32>
    %241 = arith.addf %207, %240 : vector<4x256xf32>
    %c5 = arith.constant 5 : index
    %c0_22 = arith.constant 0 : index
    %c0_23 = arith.constant 0 : index
    %242 = vector.load %arg2[%c5, %c0_22, %c0_23] : memref<9x4x4xf32, #tpu.memory_space<vmem>>, vector<1x4x4xf32>
    %243 = vector.shape_cast %242 : vector<1x4x4xf32> to vector<4x4xf32>
    %244 = vector.extract_strided_slice %243 {offsets = [0, 0], sizes = [4, 1], strides = [1, 1]} : vector<4x4xf32> to vector<4x1xf32>
    %245 = vector.extract_strided_slice %34 {offsets = [0, 0], sizes = [1, 256], strides = [1, 1]} : vector<4x256xf32> to vector<1x256xf32>
    %246 = vector.broadcast %244 : vector<4x1xf32> to vector<4x256xf32>
    %247 = vector.broadcast %245 : vector<1x256xf32> to vector<4x256xf32>
    %248 = arith.mulf %246, %247 : vector<4x256xf32>
    %249 = vector.extract_strided_slice %243 {offsets = [0, 1], sizes = [4, 1], strides = [1, 1]} : vector<4x4xf32> to vector<4x1xf32>
    %250 = vector.extract_strided_slice %34 {offsets = [1, 0], sizes = [1, 256], strides = [1, 1]} : vector<4x256xf32> to vector<1x256xf32>
    %251 = vector.broadcast %249 : vector<4x1xf32> to vector<4x256xf32>
    %252 = vector.broadcast %250 : vector<1x256xf32> to vector<4x256xf32>
    %253 = arith.mulf %251, %252 : vector<4x256xf32>
    %254 = arith.addf %248, %253 : vector<4x256xf32>
    %255 = vector.extract_strided_slice %243 {offsets = [0, 2], sizes = [4, 1], strides = [1, 1]} : vector<4x4xf32> to vector<4x1xf32>
    %256 = vector.extract_strided_slice %34 {offsets = [2, 0], sizes = [1, 256], strides = [1, 1]} : vector<4x256xf32> to vector<1x256xf32>
    %257 = vector.broadcast %255 : vector<4x1xf32> to vector<4x256xf32>
    %258 = vector.broadcast %256 : vector<1x256xf32> to vector<4x256xf32>
    %259 = arith.mulf %257, %258 : vector<4x256xf32>
    %260 = arith.addf %254, %259 : vector<4x256xf32>
    %261 = vector.extract_strided_slice %243 {offsets = [0, 3], sizes = [4, 1], strides = [1, 1]} : vector<4x4xf32> to vector<4x1xf32>
    %262 = vector.extract_strided_slice %34 {offsets = [3, 0], sizes = [1, 256], strides = [1, 1]} : vector<4x256xf32> to vector<1x256xf32>
    %263 = vector.broadcast %261 : vector<4x1xf32> to vector<4x256xf32>
    %264 = vector.broadcast %262 : vector<1x256xf32> to vector<4x256xf32>
    %265 = arith.mulf %263, %264 : vector<4x256xf32>
    %266 = arith.addf %260, %265 : vector<4x256xf32>
    %267 = arith.addf %241, %266 : vector<4x256xf32>
    %c8 = arith.constant 8 : index
    %c0_24 = arith.constant 0 : index
    %c0_25 = arith.constant 0 : index
    %268 = vector.load %arg2[%c8, %c0_24, %c0_25] : memref<9x4x4xf32, #tpu.memory_space<vmem>>, vector<1x4x4xf32>
    %269 = vector.shape_cast %268 : vector<1x4x4xf32> to vector<4x4xf32>
    %270 = vector.extract_strided_slice %269 {offsets = [0, 0], sizes = [4, 1], strides = [1, 1]} : vector<4x4xf32> to vector<4x1xf32>
    %271 = vector.extract_strided_slice %215 {offsets = [0, 0], sizes = [1, 256], strides = [1, 1]} : vector<4x256xf32> to vector<1x256xf32>
    %272 = vector.broadcast %270 : vector<4x1xf32> to vector<4x256xf32>
    %273 = vector.broadcast %271 : vector<1x256xf32> to vector<4x256xf32>
    %274 = arith.mulf %272, %273 : vector<4x256xf32>
    %275 = vector.extract_strided_slice %269 {offsets = [0, 1], sizes = [4, 1], strides = [1, 1]} : vector<4x4xf32> to vector<4x1xf32>
    %276 = vector.extract_strided_slice %215 {offsets = [1, 0], sizes = [1, 256], strides = [1, 1]} : vector<4x256xf32> to vector<1x256xf32>
    %277 = vector.broadcast %275 : vector<4x1xf32> to vector<4x256xf32>
    %278 = vector.broadcast %276 : vector<1x256xf32> to vector<4x256xf32>
    %279 = arith.mulf %277, %278 : vector<4x256xf32>
    %280 = arith.addf %274, %279 : vector<4x256xf32>
    %281 = vector.extract_strided_slice %269 {offsets = [0, 2], sizes = [4, 1], strides = [1, 1]} : vector<4x4xf32> to vector<4x1xf32>
    %282 = vector.extract_strided_slice %215 {offsets = [2, 0], sizes = [1, 256], strides = [1, 1]} : vector<4x256xf32> to vector<1x256xf32>
    %283 = vector.broadcast %281 : vector<4x1xf32> to vector<4x256xf32>
    %284 = vector.broadcast %282 : vector<1x256xf32> to vector<4x256xf32>
    %285 = arith.mulf %283, %284 : vector<4x256xf32>
    %286 = arith.addf %280, %285 : vector<4x256xf32>
    %287 = vector.extract_strided_slice %269 {offsets = [0, 3], sizes = [4, 1], strides = [1, 1]} : vector<4x4xf32> to vector<4x1xf32>
    %288 = vector.extract_strided_slice %215 {offsets = [3, 0], sizes = [1, 256], strides = [1, 1]} : vector<4x256xf32> to vector<1x256xf32>
    %289 = vector.broadcast %287 : vector<4x1xf32> to vector<4x256xf32>
    %290 = vector.broadcast %288 : vector<1x256xf32> to vector<4x256xf32>
    %291 = arith.mulf %289, %290 : vector<4x256xf32>
    %292 = arith.addf %286, %291 : vector<4x256xf32>
    %293 = arith.addf %267, %292 : vector<4x256xf32>
    %cst_26 = arith.constant dense<0.000000e+00> : vector<4xf32>
    %294 = vector.multi_reduction <add>, %293, %cst_26 [1] : vector<4x256xf32> to vector<4xf32>
    %295 = vector.shape_cast %294 : vector<4xf32> to vector<4x1xf32>
    %cst_27 = arith.constant 2.560000e+02 : f32
    %296 = vector.broadcast %cst_27 : f32 to vector<4x1xf32>
    %297 = arith.divf %295, %296 : vector<4x1xf32>
    %298 = vector.broadcast %297 : vector<4x1xf32> to vector<4x256xf32>
    %299 = arith.subf %293, %298 : vector<4x256xf32>
    %300 = arith.mulf %299, %299 : vector<4x256xf32>
    %cst_28 = arith.constant dense<0.000000e+00> : vector<4xf32>
    %301 = vector.multi_reduction <add>, %300, %cst_28 [1] : vector<4x256xf32> to vector<4xf32>
    %302 = vector.shape_cast %301 : vector<4xf32> to vector<4x1xf32>
    %cst_29 = arith.constant 2.560000e+02 : f32
    %303 = vector.broadcast %cst_29 : f32 to vector<4x1xf32>
    %304 = arith.divf %302, %303 : vector<4x1xf32>
    %cst_30 = arith.constant 9.99999974E-6 : f32
    %305 = vector.broadcast %cst_30 : f32 to vector<4x1xf32>
    %306 = arith.addf %304, %305 : vector<4x1xf32>
    %307 = math.rsqrt %306 : vector<4x1xf32>
    %308 = vector.broadcast %307 : vector<4x1xf32> to vector<4x256xf32>
    %309 = arith.mulf %299, %308 : vector<4x256xf32>
    %cst_31 = arith.constant 0.000000e+00 : f32
    %310 = vector.broadcast %cst_31 : f32 to vector<4x256xf32>
    %311 = arith.maximumf %309, %310 : vector<4x256xf32>
    %312 = vector.extract_strided_slice %311 {offsets = [0, 1], sizes = [4, 255], strides = [1, 1]} : vector<4x256xf32> to vector<4x255xf32>
    %313 = vector.extract_strided_slice %311 {offsets = [0, 0], sizes = [4, 1], strides = [1, 1]} : vector<4x256xf32> to vector<4x1xf32>
    %314 = tpu.concatenate %312, %313 in 1 : vector<4x255xf32>, vector<4x1xf32> -> vector<4x256xf32>
    %315 = vector.extract_strided_slice %311 {offsets = [0, 255], sizes = [4, 1], strides = [1, 1]} : vector<4x256xf32> to vector<4x1xf32>
    %316 = vector.extract_strided_slice %311 {offsets = [0, 0], sizes = [4, 255], strides = [1, 1]} : vector<4x256xf32> to vector<4x255xf32>
    %317 = tpu.concatenate %315, %316 in 1 : vector<4x1xf32>, vector<4x255xf32> -> vector<4x256xf32>
    %318 = arith.select %18, %314, %317 : vector<4x256xi1>, vector<4x256xf32>
    %319 = arith.select %20, %317, %314 : vector<4x256xi1>, vector<4x256xf32>
    %cst_32 = arith.constant 0.000000e+00 : f32
    %320 = vector.broadcast %cst_32 : f32 to vector<4x256xf32>
    %321 = vector.extract_strided_slice %318 {offsets = [0, 240], sizes = [4, 16], strides = [1, 1]} : vector<4x256xf32> to vector<4x16xf32>
    %322 = vector.extract_strided_slice %318 {offsets = [0, 0], sizes = [4, 240], strides = [1, 1]} : vector<4x256xf32> to vector<4x240xf32>
    %323 = tpu.concatenate %321, %322 in 1 : vector<4x16xf32>, vector<4x240xf32> -> vector<4x256xf32>
    %324 = vector.extract_strided_slice %318 {offsets = [0, 16], sizes = [4, 240], strides = [1, 1]} : vector<4x256xf32> to vector<4x240xf32>
    %325 = vector.extract_strided_slice %318 {offsets = [0, 0], sizes = [4, 16], strides = [1, 1]} : vector<4x256xf32> to vector<4x16xf32>
    %326 = tpu.concatenate %324, %325 in 1 : vector<4x240xf32>, vector<4x16xf32> -> vector<4x256xf32>
    %327 = arith.select %22, %326, %323 : vector<4x256xi1>, vector<4x256xf32>
    %328 = arith.select %24, %323, %326 : vector<4x256xi1>, vector<4x256xf32>
    %c0_33 = arith.constant 0 : index
    %c0_34 = arith.constant 0 : index
    %c0_35 = arith.constant 0 : index
    %329 = vector.load %arg3[%c0_33, %c0_34, %c0_35] : memref<9x4x4xf32, #tpu.memory_space<vmem>>, vector<1x4x4xf32>
    %330 = vector.shape_cast %329 : vector<1x4x4xf32> to vector<4x4xf32>
    %331 = vector.extract_strided_slice %330 {offsets = [0, 0], sizes = [4, 1], strides = [1, 1]} : vector<4x4xf32> to vector<4x1xf32>
    %332 = vector.extract_strided_slice %327 {offsets = [0, 0], sizes = [1, 256], strides = [1, 1]} : vector<4x256xf32> to vector<1x256xf32>
    %333 = vector.broadcast %331 : vector<4x1xf32> to vector<4x256xf32>
    %334 = vector.broadcast %332 : vector<1x256xf32> to vector<4x256xf32>
    %335 = arith.mulf %333, %334 : vector<4x256xf32>
    %336 = vector.extract_strided_slice %330 {offsets = [0, 1], sizes = [4, 1], strides = [1, 1]} : vector<4x4xf32> to vector<4x1xf32>
    %337 = vector.extract_strided_slice %327 {offsets = [1, 0], sizes = [1, 256], strides = [1, 1]} : vector<4x256xf32> to vector<1x256xf32>
    %338 = vector.broadcast %336 : vector<4x1xf32> to vector<4x256xf32>
    %339 = vector.broadcast %337 : vector<1x256xf32> to vector<4x256xf32>
    %340 = arith.mulf %338, %339 : vector<4x256xf32>
    %341 = arith.addf %335, %340 : vector<4x256xf32>
    %342 = vector.extract_strided_slice %330 {offsets = [0, 2], sizes = [4, 1], strides = [1, 1]} : vector<4x4xf32> to vector<4x1xf32>
    %343 = vector.extract_strided_slice %327 {offsets = [2, 0], sizes = [1, 256], strides = [1, 1]} : vector<4x256xf32> to vector<1x256xf32>
    %344 = vector.broadcast %342 : vector<4x1xf32> to vector<4x256xf32>
    %345 = vector.broadcast %343 : vector<1x256xf32> to vector<4x256xf32>
    %346 = arith.mulf %344, %345 : vector<4x256xf32>
    %347 = arith.addf %341, %346 : vector<4x256xf32>
    %348 = vector.extract_strided_slice %330 {offsets = [0, 3], sizes = [4, 1], strides = [1, 1]} : vector<4x4xf32> to vector<4x1xf32>
    %349 = vector.extract_strided_slice %327 {offsets = [3, 0], sizes = [1, 256], strides = [1, 1]} : vector<4x256xf32> to vector<1x256xf32>
    %350 = vector.broadcast %348 : vector<4x1xf32> to vector<4x256xf32>
    %351 = vector.broadcast %349 : vector<1x256xf32> to vector<4x256xf32>
    %352 = arith.mulf %350, %351 : vector<4x256xf32>
    %353 = arith.addf %347, %352 : vector<4x256xf32>
    %354 = arith.addf %320, %353 : vector<4x256xf32>
    %c3_36 = arith.constant 3 : index
    %c0_37 = arith.constant 0 : index
    %c0_38 = arith.constant 0 : index
    %355 = vector.load %arg3[%c3_36, %c0_37, %c0_38] : memref<9x4x4xf32, #tpu.memory_space<vmem>>, vector<1x4x4xf32>
    %356 = vector.shape_cast %355 : vector<1x4x4xf32> to vector<4x4xf32>
    %357 = vector.extract_strided_slice %356 {offsets = [0, 0], sizes = [4, 1], strides = [1, 1]} : vector<4x4xf32> to vector<4x1xf32>
    %358 = vector.extract_strided_slice %318 {offsets = [0, 0], sizes = [1, 256], strides = [1, 1]} : vector<4x256xf32> to vector<1x256xf32>
    %359 = vector.broadcast %357 : vector<4x1xf32> to vector<4x256xf32>
    %360 = vector.broadcast %358 : vector<1x256xf32> to vector<4x256xf32>
    %361 = arith.mulf %359, %360 : vector<4x256xf32>
    %362 = vector.extract_strided_slice %356 {offsets = [0, 1], sizes = [4, 1], strides = [1, 1]} : vector<4x4xf32> to vector<4x1xf32>
    %363 = vector.extract_strided_slice %318 {offsets = [1, 0], sizes = [1, 256], strides = [1, 1]} : vector<4x256xf32> to vector<1x256xf32>
    %364 = vector.broadcast %362 : vector<4x1xf32> to vector<4x256xf32>
    %365 = vector.broadcast %363 : vector<1x256xf32> to vector<4x256xf32>
    %366 = arith.mulf %364, %365 : vector<4x256xf32>
    %367 = arith.addf %361, %366 : vector<4x256xf32>
    %368 = vector.extract_strided_slice %356 {offsets = [0, 2], sizes = [4, 1], strides = [1, 1]} : vector<4x4xf32> to vector<4x1xf32>
    %369 = vector.extract_strided_slice %318 {offsets = [2, 0], sizes = [1, 256], strides = [1, 1]} : vector<4x256xf32> to vector<1x256xf32>
    %370 = vector.broadcast %368 : vector<4x1xf32> to vector<4x256xf32>
    %371 = vector.broadcast %369 : vector<1x256xf32> to vector<4x256xf32>
    %372 = arith.mulf %370, %371 : vector<4x256xf32>
    %373 = arith.addf %367, %372 : vector<4x256xf32>
    %374 = vector.extract_strided_slice %356 {offsets = [0, 3], sizes = [4, 1], strides = [1, 1]} : vector<4x4xf32> to vector<4x1xf32>
    %375 = vector.extract_strided_slice %318 {offsets = [3, 0], sizes = [1, 256], strides = [1, 1]} : vector<4x256xf32> to vector<1x256xf32>
    %376 = vector.broadcast %374 : vector<4x1xf32> to vector<4x256xf32>
    %377 = vector.broadcast %375 : vector<1x256xf32> to vector<4x256xf32>
    %378 = arith.mulf %376, %377 : vector<4x256xf32>
    %379 = arith.addf %373, %378 : vector<4x256xf32>
    %380 = arith.addf %354, %379 : vector<4x256xf32>
    %c6_39 = arith.constant 6 : index
    %c0_40 = arith.constant 0 : index
    %c0_41 = arith.constant 0 : index
    %381 = vector.load %arg3[%c6_39, %c0_40, %c0_41] : memref<9x4x4xf32, #tpu.memory_space<vmem>>, vector<1x4x4xf32>
    %382 = vector.shape_cast %381 : vector<1x4x4xf32> to vector<4x4xf32>
    %383 = vector.extract_strided_slice %382 {offsets = [0, 0], sizes = [4, 1], strides = [1, 1]} : vector<4x4xf32> to vector<4x1xf32>
    %384 = vector.extract_strided_slice %328 {offsets = [0, 0], sizes = [1, 256], strides = [1, 1]} : vector<4x256xf32> to vector<1x256xf32>
    %385 = vector.broadcast %383 : vector<4x1xf32> to vector<4x256xf32>
    %386 = vector.broadcast %384 : vector<1x256xf32> to vector<4x256xf32>
    %387 = arith.mulf %385, %386 : vector<4x256xf32>
    %388 = vector.extract_strided_slice %382 {offsets = [0, 1], sizes = [4, 1], strides = [1, 1]} : vector<4x4xf32> to vector<4x1xf32>
    %389 = vector.extract_strided_slice %328 {offsets = [1, 0], sizes = [1, 256], strides = [1, 1]} : vector<4x256xf32> to vector<1x256xf32>
    %390 = vector.broadcast %388 : vector<4x1xf32> to vector<4x256xf32>
    %391 = vector.broadcast %389 : vector<1x256xf32> to vector<4x256xf32>
    %392 = arith.mulf %390, %391 : vector<4x256xf32>
    %393 = arith.addf %387, %392 : vector<4x256xf32>
    %394 = vector.extract_strided_slice %382 {offsets = [0, 2], sizes = [4, 1], strides = [1, 1]} : vector<4x4xf32> to vector<4x1xf32>
    %395 = vector.extract_strided_slice %328 {offsets = [2, 0], sizes = [1, 256], strides = [1, 1]} : vector<4x256xf32> to vector<1x256xf32>
    %396 = vector.broadcast %394 : vector<4x1xf32> to vector<4x256xf32>
    %397 = vector.broadcast %395 : vector<1x256xf32> to vector<4x256xf32>
    %398 = arith.mulf %396, %397 : vector<4x256xf32>
    %399 = arith.addf %393, %398 : vector<4x256xf32>
    %400 = vector.extract_strided_slice %382 {offsets = [0, 3], sizes = [4, 1], strides = [1, 1]} : vector<4x4xf32> to vector<4x1xf32>
    %401 = vector.extract_strided_slice %328 {offsets = [3, 0], sizes = [1, 256], strides = [1, 1]} : vector<4x256xf32> to vector<1x256xf32>
    %402 = vector.broadcast %400 : vector<4x1xf32> to vector<4x256xf32>
    %403 = vector.broadcast %401 : vector<1x256xf32> to vector<4x256xf32>
    %404 = arith.mulf %402, %403 : vector<4x256xf32>
    %405 = arith.addf %399, %404 : vector<4x256xf32>
    %406 = arith.addf %380, %405 : vector<4x256xf32>
    %407 = vector.extract_strided_slice %311 {offsets = [0, 240], sizes = [4, 16], strides = [1, 1]} : vector<4x256xf32> to vector<4x16xf32>
    %408 = vector.extract_strided_slice %311 {offsets = [0, 0], sizes = [4, 240], strides = [1, 1]} : vector<4x256xf32> to vector<4x240xf32>
    %409 = tpu.concatenate %407, %408 in 1 : vector<4x16xf32>, vector<4x240xf32> -> vector<4x256xf32>
    %410 = vector.extract_strided_slice %311 {offsets = [0, 16], sizes = [4, 240], strides = [1, 1]} : vector<4x256xf32> to vector<4x240xf32>
    %411 = vector.extract_strided_slice %311 {offsets = [0, 0], sizes = [4, 16], strides = [1, 1]} : vector<4x256xf32> to vector<4x16xf32>
    %412 = tpu.concatenate %410, %411 in 1 : vector<4x240xf32>, vector<4x16xf32> -> vector<4x256xf32>
    %413 = arith.select %22, %412, %409 : vector<4x256xi1>, vector<4x256xf32>
    %414 = arith.select %24, %409, %412 : vector<4x256xi1>, vector<4x256xf32>
    %c1_42 = arith.constant 1 : index
    %c0_43 = arith.constant 0 : index
    %c0_44 = arith.constant 0 : index
    %415 = vector.load %arg3[%c1_42, %c0_43, %c0_44] : memref<9x4x4xf32, #tpu.memory_space<vmem>>, vector<1x4x4xf32>
    %416 = vector.shape_cast %415 : vector<1x4x4xf32> to vector<4x4xf32>
    %417 = vector.extract_strided_slice %416 {offsets = [0, 0], sizes = [4, 1], strides = [1, 1]} : vector<4x4xf32> to vector<4x1xf32>
    %418 = vector.extract_strided_slice %413 {offsets = [0, 0], sizes = [1, 256], strides = [1, 1]} : vector<4x256xf32> to vector<1x256xf32>
    %419 = vector.broadcast %417 : vector<4x1xf32> to vector<4x256xf32>
    %420 = vector.broadcast %418 : vector<1x256xf32> to vector<4x256xf32>
    %421 = arith.mulf %419, %420 : vector<4x256xf32>
    %422 = vector.extract_strided_slice %416 {offsets = [0, 1], sizes = [4, 1], strides = [1, 1]} : vector<4x4xf32> to vector<4x1xf32>
    %423 = vector.extract_strided_slice %413 {offsets = [1, 0], sizes = [1, 256], strides = [1, 1]} : vector<4x256xf32> to vector<1x256xf32>
    %424 = vector.broadcast %422 : vector<4x1xf32> to vector<4x256xf32>
    %425 = vector.broadcast %423 : vector<1x256xf32> to vector<4x256xf32>
    %426 = arith.mulf %424, %425 : vector<4x256xf32>
    %427 = arith.addf %421, %426 : vector<4x256xf32>
    %428 = vector.extract_strided_slice %416 {offsets = [0, 2], sizes = [4, 1], strides = [1, 1]} : vector<4x4xf32> to vector<4x1xf32>
    %429 = vector.extract_strided_slice %413 {offsets = [2, 0], sizes = [1, 256], strides = [1, 1]} : vector<4x256xf32> to vector<1x256xf32>
    %430 = vector.broadcast %428 : vector<4x1xf32> to vector<4x256xf32>
    %431 = vector.broadcast %429 : vector<1x256xf32> to vector<4x256xf32>
    %432 = arith.mulf %430, %431 : vector<4x256xf32>
    %433 = arith.addf %427, %432 : vector<4x256xf32>
    %434 = vector.extract_strided_slice %416 {offsets = [0, 3], sizes = [4, 1], strides = [1, 1]} : vector<4x4xf32> to vector<4x1xf32>
    %435 = vector.extract_strided_slice %413 {offsets = [3, 0], sizes = [1, 256], strides = [1, 1]} : vector<4x256xf32> to vector<1x256xf32>
    %436 = vector.broadcast %434 : vector<4x1xf32> to vector<4x256xf32>
    %437 = vector.broadcast %435 : vector<1x256xf32> to vector<4x256xf32>
    %438 = arith.mulf %436, %437 : vector<4x256xf32>
    %439 = arith.addf %433, %438 : vector<4x256xf32>
    %440 = arith.addf %406, %439 : vector<4x256xf32>
    %c4_45 = arith.constant 4 : index
    %c0_46 = arith.constant 0 : index
    %c0_47 = arith.constant 0 : index
    %441 = vector.load %arg3[%c4_45, %c0_46, %c0_47] : memref<9x4x4xf32, #tpu.memory_space<vmem>>, vector<1x4x4xf32>
    %442 = vector.shape_cast %441 : vector<1x4x4xf32> to vector<4x4xf32>
    %443 = vector.extract_strided_slice %442 {offsets = [0, 0], sizes = [4, 1], strides = [1, 1]} : vector<4x4xf32> to vector<4x1xf32>
    %444 = vector.extract_strided_slice %311 {offsets = [0, 0], sizes = [1, 256], strides = [1, 1]} : vector<4x256xf32> to vector<1x256xf32>
    %445 = vector.broadcast %443 : vector<4x1xf32> to vector<4x256xf32>
    %446 = vector.broadcast %444 : vector<1x256xf32> to vector<4x256xf32>
    %447 = arith.mulf %445, %446 : vector<4x256xf32>
    %448 = vector.extract_strided_slice %442 {offsets = [0, 1], sizes = [4, 1], strides = [1, 1]} : vector<4x4xf32> to vector<4x1xf32>
    %449 = vector.extract_strided_slice %311 {offsets = [1, 0], sizes = [1, 256], strides = [1, 1]} : vector<4x256xf32> to vector<1x256xf32>
    %450 = vector.broadcast %448 : vector<4x1xf32> to vector<4x256xf32>
    %451 = vector.broadcast %449 : vector<1x256xf32> to vector<4x256xf32>
    %452 = arith.mulf %450, %451 : vector<4x256xf32>
    %453 = arith.addf %447, %452 : vector<4x256xf32>
    %454 = vector.extract_strided_slice %442 {offsets = [0, 2], sizes = [4, 1], strides = [1, 1]} : vector<4x4xf32> to vector<4x1xf32>
    %455 = vector.extract_strided_slice %311 {offsets = [2, 0], sizes = [1, 256], strides = [1, 1]} : vector<4x256xf32> to vector<1x256xf32>
    %456 = vector.broadcast %454 : vector<4x1xf32> to vector<4x256xf32>
    %457 = vector.broadcast %455 : vector<1x256xf32> to vector<4x256xf32>
    %458 = arith.mulf %456, %457 : vector<4x256xf32>
    %459 = arith.addf %453, %458 : vector<4x256xf32>
    %460 = vector.extract_strided_slice %442 {offsets = [0, 3], sizes = [4, 1], strides = [1, 1]} : vector<4x4xf32> to vector<4x1xf32>
    %461 = vector.extract_strided_slice %311 {offsets = [3, 0], sizes = [1, 256], strides = [1, 1]} : vector<4x256xf32> to vector<1x256xf32>
    %462 = vector.broadcast %460 : vector<4x1xf32> to vector<4x256xf32>
    %463 = vector.broadcast %461 : vector<1x256xf32> to vector<4x256xf32>
    %464 = arith.mulf %462, %463 : vector<4x256xf32>
    %465 = arith.addf %459, %464 : vector<4x256xf32>
    %466 = arith.addf %440, %465 : vector<4x256xf32>
    %c7_48 = arith.constant 7 : index
    %c0_49 = arith.constant 0 : index
    %c0_50 = arith.constant 0 : index
    %467 = vector.load %arg3[%c7_48, %c0_49, %c0_50] : memref<9x4x4xf32, #tpu.memory_space<vmem>>, vector<1x4x4xf32>
    %468 = vector.shape_cast %467 : vector<1x4x4xf32> to vector<4x4xf32>
    %469 = vector.extract_strided_slice %468 {offsets = [0, 0], sizes = [4, 1], strides = [1, 1]} : vector<4x4xf32> to vector<4x1xf32>
    %470 = vector.extract_strided_slice %414 {offsets = [0, 0], sizes = [1, 256], strides = [1, 1]} : vector<4x256xf32> to vector<1x256xf32>
    %471 = vector.broadcast %469 : vector<4x1xf32> to vector<4x256xf32>
    %472 = vector.broadcast %470 : vector<1x256xf32> to vector<4x256xf32>
    %473 = arith.mulf %471, %472 : vector<4x256xf32>
    %474 = vector.extract_strided_slice %468 {offsets = [0, 1], sizes = [4, 1], strides = [1, 1]} : vector<4x4xf32> to vector<4x1xf32>
    %475 = vector.extract_strided_slice %414 {offsets = [1, 0], sizes = [1, 256], strides = [1, 1]} : vector<4x256xf32> to vector<1x256xf32>
    %476 = vector.broadcast %474 : vector<4x1xf32> to vector<4x256xf32>
    %477 = vector.broadcast %475 : vector<1x256xf32> to vector<4x256xf32>
    %478 = arith.mulf %476, %477 : vector<4x256xf32>
    %479 = arith.addf %473, %478 : vector<4x256xf32>
    %480 = vector.extract_strided_slice %468 {offsets = [0, 2], sizes = [4, 1], strides = [1, 1]} : vector<4x4xf32> to vector<4x1xf32>
    %481 = vector.extract_strided_slice %414 {offsets = [2, 0], sizes = [1, 256], strides = [1, 1]} : vector<4x256xf32> to vector<1x256xf32>
    %482 = vector.broadcast %480 : vector<4x1xf32> to vector<4x256xf32>
    %483 = vector.broadcast %481 : vector<1x256xf32> to vector<4x256xf32>
    %484 = arith.mulf %482, %483 : vector<4x256xf32>
    %485 = arith.addf %479, %484 : vector<4x256xf32>
    %486 = vector.extract_strided_slice %468 {offsets = [0, 3], sizes = [4, 1], strides = [1, 1]} : vector<4x4xf32> to vector<4x1xf32>
    %487 = vector.extract_strided_slice %414 {offsets = [3, 0], sizes = [1, 256], strides = [1, 1]} : vector<4x256xf32> to vector<1x256xf32>
    %488 = vector.broadcast %486 : vector<4x1xf32> to vector<4x256xf32>
    %489 = vector.broadcast %487 : vector<1x256xf32> to vector<4x256xf32>
    %490 = arith.mulf %488, %489 : vector<4x256xf32>
    %491 = arith.addf %485, %490 : vector<4x256xf32>
    %492 = arith.addf %466, %491 : vector<4x256xf32>
    %493 = vector.extract_strided_slice %319 {offsets = [0, 240], sizes = [4, 16], strides = [1, 1]} : vector<4x256xf32> to vector<4x16xf32>
    %494 = vector.extract_strided_slice %319 {offsets = [0, 0], sizes = [4, 240], strides = [1, 1]} : vector<4x256xf32> to vector<4x240xf32>
    %495 = tpu.concatenate %493, %494 in 1 : vector<4x16xf32>, vector<4x240xf32> -> vector<4x256xf32>
    %496 = vector.extract_strided_slice %319 {offsets = [0, 16], sizes = [4, 240], strides = [1, 1]} : vector<4x256xf32> to vector<4x240xf32>
    %497 = vector.extract_strided_slice %319 {offsets = [0, 0], sizes = [4, 16], strides = [1, 1]} : vector<4x256xf32> to vector<4x16xf32>
    %498 = tpu.concatenate %496, %497 in 1 : vector<4x240xf32>, vector<4x16xf32> -> vector<4x256xf32>
    %499 = arith.select %22, %498, %495 : vector<4x256xi1>, vector<4x256xf32>
    %500 = arith.select %24, %495, %498 : vector<4x256xi1>, vector<4x256xf32>
    %c2_51 = arith.constant 2 : index
    %c0_52 = arith.constant 0 : index
    %c0_53 = arith.constant 0 : index
    %501 = vector.load %arg3[%c2_51, %c0_52, %c0_53] : memref<9x4x4xf32, #tpu.memory_space<vmem>>, vector<1x4x4xf32>
    %502 = vector.shape_cast %501 : vector<1x4x4xf32> to vector<4x4xf32>
    %503 = vector.extract_strided_slice %502 {offsets = [0, 0], sizes = [4, 1], strides = [1, 1]} : vector<4x4xf32> to vector<4x1xf32>
    %504 = vector.extract_strided_slice %499 {offsets = [0, 0], sizes = [1, 256], strides = [1, 1]} : vector<4x256xf32> to vector<1x256xf32>
    %505 = vector.broadcast %503 : vector<4x1xf32> to vector<4x256xf32>
    %506 = vector.broadcast %504 : vector<1x256xf32> to vector<4x256xf32>
    %507 = arith.mulf %505, %506 : vector<4x256xf32>
    %508 = vector.extract_strided_slice %502 {offsets = [0, 1], sizes = [4, 1], strides = [1, 1]} : vector<4x4xf32> to vector<4x1xf32>
    %509 = vector.extract_strided_slice %499 {offsets = [1, 0], sizes = [1, 256], strides = [1, 1]} : vector<4x256xf32> to vector<1x256xf32>
    %510 = vector.broadcast %508 : vector<4x1xf32> to vector<4x256xf32>
    %511 = vector.broadcast %509 : vector<1x256xf32> to vector<4x256xf32>
    %512 = arith.mulf %510, %511 : vector<4x256xf32>
    %513 = arith.addf %507, %512 : vector<4x256xf32>
    %514 = vector.extract_strided_slice %502 {offsets = [0, 2], sizes = [4, 1], strides = [1, 1]} : vector<4x4xf32> to vector<4x1xf32>
    %515 = vector.extract_strided_slice %499 {offsets = [2, 0], sizes = [1, 256], strides = [1, 1]} : vector<4x256xf32> to vector<1x256xf32>
    %516 = vector.broadcast %514 : vector<4x1xf32> to vector<4x256xf32>
    %517 = vector.broadcast %515 : vector<1x256xf32> to vector<4x256xf32>
    %518 = arith.mulf %516, %517 : vector<4x256xf32>
    %519 = arith.addf %513, %518 : vector<4x256xf32>
    %520 = vector.extract_strided_slice %502 {offsets = [0, 3], sizes = [4, 1], strides = [1, 1]} : vector<4x4xf32> to vector<4x1xf32>
    %521 = vector.extract_strided_slice %499 {offsets = [3, 0], sizes = [1, 256], strides = [1, 1]} : vector<4x256xf32> to vector<1x256xf32>
    %522 = vector.broadcast %520 : vector<4x1xf32> to vector<4x256xf32>
    %523 = vector.broadcast %521 : vector<1x256xf32> to vector<4x256xf32>
    %524 = arith.mulf %522, %523 : vector<4x256xf32>
    %525 = arith.addf %519, %524 : vector<4x256xf32>
    %526 = arith.addf %492, %525 : vector<4x256xf32>
    %c5_54 = arith.constant 5 : index
    %c0_55 = arith.constant 0 : index
    %c0_56 = arith.constant 0 : index
    %527 = vector.load %arg3[%c5_54, %c0_55, %c0_56] : memref<9x4x4xf32, #tpu.memory_space<vmem>>, vector<1x4x4xf32>
    %528 = vector.shape_cast %527 : vector<1x4x4xf32> to vector<4x4xf32>
    %529 = vector.extract_strided_slice %528 {offsets = [0, 0], sizes = [4, 1], strides = [1, 1]} : vector<4x4xf32> to vector<4x1xf32>
    %530 = vector.extract_strided_slice %319 {offsets = [0, 0], sizes = [1, 256], strides = [1, 1]} : vector<4x256xf32> to vector<1x256xf32>
    %531 = vector.broadcast %529 : vector<4x1xf32> to vector<4x256xf32>
    %532 = vector.broadcast %530 : vector<1x256xf32> to vector<4x256xf32>
    %533 = arith.mulf %531, %532 : vector<4x256xf32>
    %534 = vector.extract_strided_slice %528 {offsets = [0, 1], sizes = [4, 1], strides = [1, 1]} : vector<4x4xf32> to vector<4x1xf32>
    %535 = vector.extract_strided_slice %319 {offsets = [1, 0], sizes = [1, 256], strides = [1, 1]} : vector<4x256xf32> to vector<1x256xf32>
    %536 = vector.broadcast %534 : vector<4x1xf32> to vector<4x256xf32>
    %537 = vector.broadcast %535 : vector<1x256xf32> to vector<4x256xf32>
    %538 = arith.mulf %536, %537 : vector<4x256xf32>
    %539 = arith.addf %533, %538 : vector<4x256xf32>
    %540 = vector.extract_strided_slice %528 {offsets = [0, 2], sizes = [4, 1], strides = [1, 1]} : vector<4x4xf32> to vector<4x1xf32>
    %541 = vector.extract_strided_slice %319 {offsets = [2, 0], sizes = [1, 256], strides = [1, 1]} : vector<4x256xf32> to vector<1x256xf32>
    %542 = vector.broadcast %540 : vector<4x1xf32> to vector<4x256xf32>
    %543 = vector.broadcast %541 : vector<1x256xf32> to vector<4x256xf32>
    %544 = arith.mulf %542, %543 : vector<4x256xf32>
    %545 = arith.addf %539, %544 : vector<4x256xf32>
    %546 = vector.extract_strided_slice %528 {offsets = [0, 3], sizes = [4, 1], strides = [1, 1]} : vector<4x4xf32> to vector<4x1xf32>
    %547 = vector.extract_strided_slice %319 {offsets = [3, 0], sizes = [1, 256], strides = [1, 1]} : vector<4x256xf32> to vector<1x256xf32>
    %548 = vector.broadcast %546 : vector<4x1xf32> to vector<4x256xf32>
    %549 = vector.broadcast %547 : vector<1x256xf32> to vector<4x256xf32>
    %550 = arith.mulf %548, %549 : vector<4x256xf32>
    %551 = arith.addf %545, %550 : vector<4x256xf32>
    %552 = arith.addf %526, %551 : vector<4x256xf32>
    %c8_57 = arith.constant 8 : index
    %c0_58 = arith.constant 0 : index
    %c0_59 = arith.constant 0 : index
    %553 = vector.load %arg3[%c8_57, %c0_58, %c0_59] : memref<9x4x4xf32, #tpu.memory_space<vmem>>, vector<1x4x4xf32>
    %554 = vector.shape_cast %553 : vector<1x4x4xf32> to vector<4x4xf32>
    %555 = vector.extract_strided_slice %554 {offsets = [0, 0], sizes = [4, 1], strides = [1, 1]} : vector<4x4xf32> to vector<4x1xf32>
    %556 = vector.extract_strided_slice %500 {offsets = [0, 0], sizes = [1, 256], strides = [1, 1]} : vector<4x256xf32> to vector<1x256xf32>
    %557 = vector.broadcast %555 : vector<4x1xf32> to vector<4x256xf32>
    %558 = vector.broadcast %556 : vector<1x256xf32> to vector<4x256xf32>
    %559 = arith.mulf %557, %558 : vector<4x256xf32>
    %560 = vector.extract_strided_slice %554 {offsets = [0, 1], sizes = [4, 1], strides = [1, 1]} : vector<4x4xf32> to vector<4x1xf32>
    %561 = vector.extract_strided_slice %500 {offsets = [1, 0], sizes = [1, 256], strides = [1, 1]} : vector<4x256xf32> to vector<1x256xf32>
    %562 = vector.broadcast %560 : vector<4x1xf32> to vector<4x256xf32>
    %563 = vector.broadcast %561 : vector<1x256xf32> to vector<4x256xf32>
    %564 = arith.mulf %562, %563 : vector<4x256xf32>
    %565 = arith.addf %559, %564 : vector<4x256xf32>
    %566 = vector.extract_strided_slice %554 {offsets = [0, 2], sizes = [4, 1], strides = [1, 1]} : vector<4x4xf32> to vector<4x1xf32>
    %567 = vector.extract_strided_slice %500 {offsets = [2, 0], sizes = [1, 256], strides = [1, 1]} : vector<4x256xf32> to vector<1x256xf32>
    %568 = vector.broadcast %566 : vector<4x1xf32> to vector<4x256xf32>
    %569 = vector.broadcast %567 : vector<1x256xf32> to vector<4x256xf32>
    %570 = arith.mulf %568, %569 : vector<4x256xf32>
    %571 = arith.addf %565, %570 : vector<4x256xf32>
    %572 = vector.extract_strided_slice %554 {offsets = [0, 3], sizes = [4, 1], strides = [1, 1]} : vector<4x4xf32> to vector<4x1xf32>
    %573 = vector.extract_strided_slice %500 {offsets = [3, 0], sizes = [1, 256], strides = [1, 1]} : vector<4x256xf32> to vector<1x256xf32>
    %574 = vector.broadcast %572 : vector<4x1xf32> to vector<4x256xf32>
    %575 = vector.broadcast %573 : vector<1x256xf32> to vector<4x256xf32>
    %576 = arith.mulf %574, %575 : vector<4x256xf32>
    %577 = arith.addf %571, %576 : vector<4x256xf32>
    %578 = arith.addf %552, %577 : vector<4x256xf32>
    %cst_60 = arith.constant dense<0.000000e+00> : vector<4xf32>
    %579 = vector.multi_reduction <add>, %578, %cst_60 [1] : vector<4x256xf32> to vector<4xf32>
    %580 = vector.shape_cast %579 : vector<4xf32> to vector<4x1xf32>
    %cst_61 = arith.constant 2.560000e+02 : f32
    %581 = vector.broadcast %cst_61 : f32 to vector<4x1xf32>
    %582 = arith.divf %580, %581 : vector<4x1xf32>
    %583 = vector.broadcast %582 : vector<4x1xf32> to vector<4x256xf32>
    %584 = arith.subf %578, %583 : vector<4x256xf32>
    %585 = arith.mulf %584, %584 : vector<4x256xf32>
    %cst_62 = arith.constant dense<0.000000e+00> : vector<4xf32>
    %586 = vector.multi_reduction <add>, %585, %cst_62 [1] : vector<4x256xf32> to vector<4xf32>
    %587 = vector.shape_cast %586 : vector<4xf32> to vector<4x1xf32>
    %cst_63 = arith.constant 2.560000e+02 : f32
    %588 = vector.broadcast %cst_63 : f32 to vector<4x1xf32>
    %589 = arith.divf %587, %588 : vector<4x1xf32>
    %cst_64 = arith.constant 9.99999974E-6 : f32
    %590 = vector.broadcast %cst_64 : f32 to vector<4x1xf32>
    %591 = arith.addf %589, %590 : vector<4x1xf32>
    %592 = math.rsqrt %591 : vector<4x1xf32>
    %593 = vector.broadcast %592 : vector<4x1xf32> to vector<4x256xf32>
    %594 = arith.mulf %584, %593 : vector<4x256xf32>
    %c0_65 = arith.constant 0 : index
    %c0_66 = arith.constant 0 : index
    %c0_67 = arith.constant 0 : index
    %595 = vector.load %arg1[%c0_65, %c0_66, %c0_67] : memref<1x4x256xf32, #tpu.memory_space<vmem>>, vector<1x4x256xf32>
    %596 = vector.shape_cast %595 : vector<1x4x256xf32> to vector<4x256xf32>
    %597 = arith.addf %596, %594 : vector<4x256xf32>
    %c0_68 = arith.constant 0 : index
    %c0_69 = arith.constant 0 : index
    %c0_70 = arith.constant 0 : index
    %598 = vector.load %arg4[%c0_68, %c0_69, %c0_70] : memref<1x4x256xf32, #tpu.memory_space<vmem>>, vector<1x4x256xf32>
    %599 = vector.shape_cast %598 : vector<1x4x256xf32> to vector<4x256xf32>
    %600 = vector.shape_cast %597 : vector<4x256xf32> to vector<1x4x256xf32>
    tpu.vector_store %arg4[%c0_68, %c0_69, %c0_70], %600 {strides = array<i32>} : memref<1x4x256xf32, #tpu.memory_space<vmem>>, vector<1x4x256xf32>,
    return
  }
  func.func @transform_0(%arg0: i32) -> (i32, i32, i32) {
    %c0_i32 = arith.constant 0 : i32
    %c0_i32_0 = arith.constant 0 : i32
    %c0_i32_1 = arith.constant 0 : i32
    return %arg0, %c0_i32, %c0_i32_0 : i32, i32, i32
  }
  func.func @transform_1(%arg0: i32) -> (i32, i32, i32) {
    %c0_i32 = arith.constant 0 : i32
    %c0_i32_0 = arith.constant 0 : i32
    %c0_i32_1 = arith.constant 0 : i32
    %c0_i32_2 = arith.constant 0 : i32
    return %c0_i32, %c0_i32_0, %c0_i32_1 : i32, i32, i32
  }
  func.func @transform_2(%arg0: i32) -> (i32, i32, i32) {
    %c0_i32 = arith.constant 0 : i32
    %c0_i32_0 = arith.constant 0 : i32
    %c0_i32_1 = arith.constant 0 : i32
    %c0_i32_2 = arith.constant 0 : i32
    return %c0_i32, %c0_i32_0, %c0_i32_1 : i32, i32, i32
  }
  func.func @transform_3(%arg0: i32) -> (i32, i32, i32) {
    %c0_i32 = arith.constant 0 : i32
    %c0_i32_0 = arith.constant 0 : i32
    %c0_i32_1 = arith.constant 0 : i32
    return %arg0, %c0_i32, %c0_i32_0 : i32, i32, i32
  }
}

</mosaic_0001>

<llo_original>
// kernel: tpu_custom_call.1
$region0: #{tpu_custom_call.1}
  #allocation0 [shape = 'u32[]', space=smem, size = 0x4, offset = 0x4, fixed_abs, tag = 'smem constant byte address 0x4 - core index']
  #allocation1 [shape = 'u32[72,128]{1,0:T(1,128)}', space=vmem, size = 0x9000, scoped, tag = 'internal scratch']
  %s0 = inlined_call_operand.vmem [shape: f32[2,4,256], index: 0, kind: input, shape index: {}]
  %s1 = inlined_call_operand.vmem [shape: f32[9,4,4], index: 1, kind: input, shape index: {}]
  %s2 = inlined_call_operand.vmem [shape: f32[9,4,4], index: 2, kind: input, shape index: {}]
  %s3 = inlined_call_operand.hbm [shape: f32[2,4,256], index: 3, kind: output, shape index: {}]
  %s4 = sld [smem:[#allocation0]]
  $region45: #{tpu_custom_call.1} parent=0
    _
  %s6 = ssub.s32 1, %s4
  %s7 = scalar_select 0, %s6, %s4
  $region1: #{tpu_custom_call.1} parent=0
    #allocation2 [shape = 'u8[8192]{0}', space=vmem, size = 0x2000, scoped, tag = 'output window, operand 0']
    #allocation3 [shape = 's32[2]{0}', space=sflag, size = 0x8, scoped, tag = 'scoped memory for tpu_custom_call.1']
    %8 = vsyncpa [#allocation3], 0
    %s9 = scalar_lea.sflag [#allocation3], 1
    %10 = vsyncpa %s9, 0
    loop: start=0, step=1, limit=4
    $region2: #{tpu_custom_call.1} parent=1 // loop_pre_header
      _
    $region3: #{tpu_custom_call.1} parent=1 // loop_header
      %s12 = sphi 0, %s16
      %p13 = scmp.ge.s32.totalorder %s12, 4
      %s22 = sphi 0, %s24
      %s25 = sphi 0, %s22
      %s26 = sphi 0, %s25
      %s42 = sphi 0, %s26
      %s46 = sphi 0, %s46
      %s48 = sphi 0, %s46
      %s49 = sphi 0, %s48
      %s63 = sphi 0, %s49
      %s67 = sphi 0, %s67
      %s69 = sphi 0, %s67
      %s70 = sphi 0, %s69
      %s84 = sphi 0, %s70
      %s90 = sphi 0, %s92
      %s93 = sphi 0, %s90
      %s94 = sphi 0, %s93
      %s110 = sphi 0, %s94
    $region4: #{tpu_custom_call.1} parent=1 // loop_header_branch
      %15 = sbr.rel (%p13) target = $region8
    $region5: #{tpu_custom_call.1} parent=1 // loop_body
      %s17 = ssub.s32 %s12, 1
      %s18 = ssub.s32 %s12, 2
      %s19 = sadd.s32 %s12, 1
      %s20 = ssub.s32 %s12, %s19
      %p21 = scmp.eq.s32.totalorder %s20, 0
      %s23 = sadd.s32 %s22, 1
      %s24 = scalar_select %p21, %s22, %s23
      %p27 = pneg %p21
      %p28 = scmp.eq.s32.totalorder %s12, 1
      %p29 = por %p27, %p28
      %p30 = scmp.ne.s32.totalorder %s22, %s25
      %p31 = scmp.eq.s32.totalorder %s12, 0
      %p32 = por %p30, %p31
      %p33 = scmp.ne.s32.totalorder %s22, %s25
      %p34 = scmp.eq.s32.totalorder %s17, 1
      %p35 = por %p33, %p34
      %p36 = scmp.ne.s32.totalorder %s25, %s26
      %p37 = scmp.eq.s32.totalorder %s17, 0
      %p38 = por %p36, %p37
      %p39 = scmp.ne.s32.totalorder %s25, %s26
      %p40 = scmp.eq.s32.totalorder %s18, 1
      %p41 = por %p39, %p40
      %p43 = scmp.ne.s32.totalorder %s26, %s42
      %p44 = scmp.eq.s32.totalorder %s18, 0
      %p45 = por %p43, %p44
      %s47 = sadd.s32 %s46, 1
      %p50 = scmp.eq.s32.totalorder %s12, 1
      %p51 = scmp.ne.s32.totalorder %s46, %s48
      %p52 = scmp.eq.s32.totalorder %s12, 0
      %p53 = por %p51, %p52
      %p54 = scmp.ne.s32.totalorder %s46, %s48
      %p55 = scmp.eq.s32.totalorder %s17, 1
      %p56 = por %p54, %p55
      %p57 = scmp.ne.s32.totalorder %s48, %s49
      %p58 = scmp.eq.s32.totalorder %s17, 0
      %p59 = por %p57, %p58
      %p60 = scmp.ne.s32.totalorder %s48, %s49
      %p61 = scmp.eq.s32.totalorder %s18, 1
      %p62 = por %p60, %p61
      %p64 = scmp.ne.s32.totalorder %s49, %s63
      %p65 = scmp.eq.s32.totalorder %s18, 0
      %p66 = por %p64, %p65
      %s68 = sadd.s32 %s67, 1
      %p71 = scmp.eq.s32.totalorder %s12, 1
      %p72 = scmp.ne.s32.totalorder %s67, %s69
      %p73 = scmp.eq.s32.totalorder %s12, 0
      %p74 = por %p72, %p73
      %p75 = scmp.ne.s32.totalorder %s67, %s69
      %p76 = scmp.eq.s32.totalorder %s17, 1
      %p77 = por %p75, %p76
      %p78 = scmp.ne.s32.totalorder %s69, %s70
      %p79 = scmp.eq.s32.totalorder %s17, 0
      %p80 = por %p78, %p79
      %p81 = scmp.ne.s32.totalorder %s69, %s70
      %p82 = scmp.eq.s32.totalorder %s18, 1
      %p83 = por %p81, %p82
      %p85 = scmp.ne.s32.totalorder %s70, %s84
      %p86 = scmp.eq.s32.totalorder %s18, 0
      %p87 = por %p85, %p86
      %s88 = ssub.s32 %s12, %s19
      %p89 = scmp.eq.s32.totalorder %s88, 0
      %s91 = sadd.s32 %s90, 1
      %s92 = scalar_select %p89, %s90, %s91
      %p95 = pneg %p89
      %p96 = scmp.eq.s32.totalorder %s12, 1
      %p97 = por %p95, %p96
      %p98 = scmp.ne.s32.totalorder %s90, %s93
      %p99 = scmp.eq.s32.totalorder %s12, 0
      %p100 = por %p98, %p99
      %p101 = scmp.ne.s32.totalorder %s90, %s93
      %p102 = scmp.eq.s32.totalorder %s17, 1
      %p103 = por %p101, %p102
      %p104 = scmp.ne.s32.totalorder %s93, %s94
      %p105 = scmp.eq.s32.totalorder %s17, 0
      %p106 = por %p104, %p105
      %p107 = scmp.ne.s32.totalorder %s93, %s94
      %p108 = scmp.eq.s32.totalorder %s18, 1
      %p109 = por %p107, %p108
      %p111 = scmp.ne.s32.totalorder %s94, %s110
      %p112 = scmp.eq.s32.totalorder %s18, 0
      %p113 = por %p111, %p112
      %p114 = scmp.le.s32.totalorder 1, %s12
      %p115 = scmp.lt.s32.totalorder %s12, 3
      %p116 = pnand %p114, %p115
      %p117 = pneg %p116
      // Predicated region
      $region9: #{tpu_custom_call.1} parent=5 // pred_check
        _
      $region10: #{tpu_custom_call.1} parent=5 // pred_check_branch
        %119 = sbr.rel (%p116) target = $region12
      $region11: #{tpu_custom_call.1} parent=5 // pred_region
        %s120 = ssub.s32 %s12, 1
        // Predicated region
        $region13: #{tpu_custom_call.1} parent=11 // pred_check
          %p121 = pneg %p59
        $region14: #{tpu_custom_call.1} parent=11 // pred_check_branch
          %123 = sbr.rel (%p121) target = $region16
        $region15: #{tpu_custom_call.1} parent=11 // pred_region
          _
        $region16: #{tpu_custom_call.1} parent=11 // pred_fallthru
          _
        // Predicated region
        $region17: #{tpu_custom_call.1} parent=11 // pred_check
          %p124 = pneg %p80
        $region18: #{tpu_custom_call.1} parent=11 // pred_check_branch
          %126 = sbr.rel (%p124) target = $region20
        $region19: #{tpu_custom_call.1} parent=11 // pred_region
          _
        $region20: #{tpu_custom_call.1} parent=11 // pred_fallthru
          _
      $region12: #{tpu_custom_call.1} parent=5 // pred_fallthru
        _
      %p127 = scmp.lt.s32.totalorder %s12, 2
      // Predicated region
      $region21: #{tpu_custom_call.1} parent=5 // pred_check
        %p128 = pneg %p127
      $region22: #{tpu_custom_call.1} parent=5 // pred_check_branch
        %130 = sbr.rel (%p128) target = $region24
      $region23: #{tpu_custom_call.1} parent=5 // pred_region
        // Predicated region
        $region25: #{tpu_custom_call.1} parent=23 // pred_check
          %p131 = pneg %p32
        $region26: #{tpu_custom_call.1} parent=23 // pred_check_branch
          %133 = sbr.rel (%p131) target = $region28
        $region27: #{tpu_custom_call.1} parent=23 // pred_region
          %p134 = scmp.lt.s32.totalorder %s12, 1
          %s135 = scalar_select %p134, %s12, 1
          %s136 = smul.addr %s135, 2
          %s137 = smul.addr %s136, 4
          %s138 = scalar_lea.vmem %s0, %s137
        $region28: #{tpu_custom_call.1} parent=23 // pred_fallthru
          _
      $region24: #{tpu_custom_call.1} parent=5 // pred_fallthru
        _
      %p139 = scmp.le.s32.totalorder 1, %s12
      %p140 = scmp.lt.s32.totalorder %s12, 3
      %p141 = pnand %p139, %p140
      %p142 = pneg %p141
      // Predicated region
      $region29: #{tpu_custom_call.1} parent=5 // pred_check
        _
      $region30: #{tpu_custom_call.1} parent=5 // pred_check_branch
        %144 = sbr.rel (%p141) target = $region32
      $region31: #{tpu_custom_call.1} parent=5 // pred_region
        %s145 = ssub.s32 %s12, 1
        %p146 = scmp.lt.s32.totalorder %s17, 1
        %s147 = scalar_select %p146, %s17, 1
        %s148 = smul.addr %s147, 2
        %s149 = smul.addr %s148, 4
        %s150 = scalar_lea.vmem %s0, %s149
        %p151 = pneg %p38
        %p152 = pneg %p35
        %p153 = pneg %p59
        %p154 = pneg %p56
        %p155 = pneg %p80
        %p156 = pneg %p77
        %p157 = pneg %p106
        %p158 = pneg %p103
        %s159 = sand.u32 %s93, 1
        %s160 = scalar_lea.sflag [#allocation3], %s159
        %s161 = sand.u32 %s93, 1
        %s162 = smul.addr %s161, 8
        %s163 = scalar_lea.vmem [#allocation2], %s162
        %p164 = scmp.lt.s32.totalorder %s17, 1
        %s165 = scalar_select %p164, %s17, 1
        %s166 = smul.addr %s165, 2
        %s167 = smul.addr %s166, 4
        %s168 = scalar_lea.vmem %s0, %s167
        %v169 = vlaneseq
        %v170 = vand.u32 %v169, 127
        %v171 = vadd.s32 %v170, 128
        %vm172 = vcmp.lt.s32.totalorder %v170, 0
        %v173 = vsub.s32 0, %v170
        %v174 = vsel %vm172, %v173, %v170
        %v175 = vshrl.u32 %v174, 4
        %v176 = vand.u32 %v174, 15
        %v177 = vsub.s32 0, %v176
        %v178 = vsel %vm172, %v177, %v176
        %vm179 = vcmp.lt.s32.totalorder %v171, 0
        %v180 = vsub.s32 0, %v171
        %v181 = vsel %vm179, %v180, %v171
        %v182 = vshrl.u32 %v181, 4
        %v183 = vand.u32 %v181, 15
        %v184 = vsub.s32 0, %v183
        %v185 = vsel %vm179, %v184, %v183
        %vm186 = vcmp.ne.s32.totalorder %v178, 0
        %vm187 = vcmp.ne.s32.totalorder %v185, 0
        %vm188 = vcmp.lt.s32.totalorder %v178, 0
        %vm189 = vcmp.lt.s32.totalorder %v185, 0
        %vm190 = vmand %vm188, %vm186
        %vm191 = vmand %vm189, %vm187
        %v192 = vadd.s32 %v178, 16
        %v193 = vadd.s32 %v185, 16
        %v194 = vsel %vm190, %v192, %v178
        %v195 = vsel %vm191, %v193, %v185
        %vm196 = vcmp.eq.s32.totalorder %v194, 0
        %vm197 = vcmp.eq.s32.totalorder %v195, 0
        %vm198 = vcmp.eq.s32.totalorder %v194, 15
        %vm199 = vcmp.eq.s32.totalorder %v195, 15
        %vm200 = vcmp.lt.s32.totalorder %v170, 16
        %vm201 = vcmp.lt.s32.totalorder %v171, 16
        %vm202 = vcmp.ge.s32.totalorder %v170, 240
        %vm203 = vcmp.ge.s32.totalorder %v171, 240
        %v204 = vld [vmem:[%s168] sm:$0xff]
        %206 = vst [vmem:[#allocation1] ss:$2 sm:$0xff] %v204
        %v207 = vld.sshfl [vmem:[#allocation1] sm:$0xff pattern:$0x75316420]
        %v208 = vld.sshfl [vmem:[#allocation1 + $0x8] sm:$0xff pattern:$0x75316420]
        %209 = vrot.lane.b32.xlu0 %v207, 127
        %v210 = vpop.permute.xlu0 %209
        %211 = vrot.lane.b32.xlu0 %v208, 127
        %v212 = vpop.permute.xlu0 %211
        %vm213 = vcmask 1039360
        %v214 = vsel %vm213, %v210, %v212
        %217 = vst [vmem:[#allocation1] ss:$2 sm:$0xff] %v204
        %v218 = vld.sshfl [vmem:[#allocation1] sm:$0xff pattern:$0x75316420]
        %219 = vrot.lane.b32.xlu0 %v218, 127
        %v220 = vpop.permute.xlu0 %219
        %v222 = vsel %vm213, %v212, %v220
        %223 = vst [vmem:[#allocation1] ss:$2 sm:$0xff] %v204
        %v224 = vld.sshfl [vmem:[#allocation1 + $0x8] sm:$0xff pattern:$0x75316420]
        %225 = vrot.lane.b32.xlu0 %v224, 1
        %v226 = vpop.permute.xlu0 %225
        %228 = vst [vmem:[#allocation1] ss:$2 sm:$0xff] %v204
        %v229 = vld.sshfl [vmem:[#allocation1] sm:$0xff pattern:$0x75316420]
        %v230 = vld.sshfl [vmem:[#allocation1 + $0x8] sm:$0xff pattern:$0x75316420]
        %231 = vrot.lane.b32.xlu0 %v229, 1
        %v232 = vpop.permute.xlu0 %231
        %233 = vrot.lane.b32.xlu0 %v230, 1
        %v234 = vpop.permute.xlu0 %233
        %vm235 = vcmask 7168
        %v236 = vsel %vm235, %v232, %v234
        %v239 = vsel %vm235, %v226, %v232
        %v240 = vsel %vm196, %v214, %v239
        %v241 = vsel %vm197, %v222, %v236
        %v242 = vsel %vm198, %v239, %v214
        %v243 = vsel %vm199, %v236, %v222
        %245 = vrot.lane.b32.xlu0 %v241, 16
        %v246 = vpop.permute.xlu0 %245
        %249 = vrot.lane.b32.xlu0 %v240, 16
        %v250 = vpop.permute.xlu0 %249
        %vm251 = vcmask 130048
        %v252 = vsel %vm251, %v250, %v246
        %v255 = vsel %vm251, %v246, %v250
        %256 = vrot.lane.b32.xlu0 %v240, 112
        %v257 = vpop.permute.xlu0 %256
        %258 = vrot.lane.b32.xlu0 %v241, 112
        %v259 = vpop.permute.xlu0 %258
        %vm260 = vcmask 916480
        %v261 = vsel %vm260, %v257, %v259
        %v265 = vsel %vm260, %v259, %v257
        %v266 = vsel %vm200, %v261, %v255
        %v267 = vsel %vm201, %v265, %v252
        %v268 = vsel %vm202, %v255, %v261
        %v269 = vsel %vm203, %v252, %v265
        %v270 = vld [vmem:[%s1] sm:$0xf]
        %272 = vset.pattern.permute.xlu0 0
        %273 = vperm.xlu0 %272, %v270
        %v274 = vpop.permute.xlu0 %273
        %v276 = vperm.slane %v266, 0
        %v277 = vperm.slane %v267, 0
        %v278 = vmul.f32 %v274, %v276
        %v279 = vmul.f32 %v274, %v277
        %280 = vset.pattern.permute.xlu0 1
        %281 = vperm.xlu0 %280, %v270
        %v282 = vpop.permute.xlu0 %281
        %v284 = vperm.slane %v266, 1
        %v285 = vperm.slane %v267, 1
        %v286 = vmul.f32 %v282, %v284
        %v287 = vmul.f32 %v282, %v285
        %v288 = vadd.f32 %v278, %v286
        %v289 = vadd.f32 %v279, %v287
        %290 = vset.pattern.permute.xlu0 2
        %291 = vperm.xlu0 %290, %v270
        %v292 = vpop.permute.xlu0 %291
        %v294 = vperm.slane %v266, 2
        %v295 = vperm.slane %v267, 2
        %v296 = vmul.f32 %v292, %v294
        %v297 = vmul.f32 %v292, %v295
        %v298 = vadd.f32 %v288, %v296
        %v299 = vadd.f32 %v289, %v297
        %300 = vset.pattern.permute.xlu0 3
        %301 = vperm.xlu0 %300, %v270
        %v302 = vpop.permute.xlu0 %301
        %v304 = vperm.slane %v266, 3
        %v305 = vperm.slane %v267, 3
        %v306 = vmul.f32 %v302, %v304
        %v307 = vmul.f32 %v302, %v305
        %v308 = vadd.f32 %v298, %v306
        %v309 = vadd.f32 %v299, %v307
        %v310 = vadd.f32 %v308, 0.0
        %v311 = vadd.f32 %v309, 0.0
        %s312 = scalar_lea.vmem %s1, 12
        %v313 = vld [vmem:[%s312] sm:$0xf]
        %315 = vset.pattern.permute.xlu0 0
        %316 = vperm.xlu0 %315, %v313
        %v317 = vpop.permute.xlu0 %316
        %v319 = vperm.slane %v240, 0
        %v320 = vperm.slane %v241, 0
        %v321 = vmul.f32 %v317, %v319
        %v322 = vmul.f32 %v317, %v320
        %323 = vset.pattern.permute.xlu0 1
        %324 = vperm.xlu0 %323, %v313
        %v325 = vpop.permute.xlu0 %324
        %v327 = vperm.slane %v240, 1
        %v328 = vperm.slane %v241, 1
        %v329 = vmul.f32 %v325, %v327
        %v330 = vmul.f32 %v325, %v328
        %v331 = vadd.f32 %v321, %v329
        %v332 = vadd.f32 %v322, %v330
        %333 = vset.pattern.permute.xlu0 2
        %334 = vperm.xlu0 %333, %v313
        %v335 = vpop.permute.xlu0 %334
        %v337 = vperm.slane %v240, 2
        %v338 = vperm.slane %v241, 2
        %v339 = vmul.f32 %v335, %v337
        %v340 = vmul.f32 %v335, %v338
        %v341 = vadd.f32 %v331, %v339
        %v342 = vadd.f32 %v332, %v340
        %343 = vset.pattern.permute.xlu0 3
        %344 = vperm.xlu0 %343, %v313
        %v345 = vpop.permute.xlu0 %344
        %v347 = vperm.slane %v240, 3
        %v348 = vperm.slane %v241, 3
        %v349 = vmul.f32 %v345, %v347
        %v350 = vmul.f32 %v345, %v348
        %v351 = vadd.f32 %v341, %v349
        %v352 = vadd.f32 %v342, %v350
        %v353 = vadd.f32 %v310, %v351
        %v354 = vadd.f32 %v311, %v352
        %s355 = scalar_lea.vmem %s1, 24
        %v356 = vld [vmem:[%s355] sm:$0xf]
        %358 = vset.pattern.permute.xlu0 0
        %359 = vperm.xlu0 %358, %v356
        %v360 = vpop.permute.xlu0 %359
        %v362 = vperm.slane %v268, 0
        %v363 = vperm.slane %v269, 0
        %v364 = vmul.f32 %v360, %v362
        %v365 = vmul.f32 %v360, %v363
        %366 = vset.pattern.permute.xlu0 1
        %367 = vperm.xlu0 %366, %v356
        %v368 = vpop.permute.xlu0 %367
        %v370 = vperm.slane %v268, 1
        %v371 = vperm.slane %v269, 1
        %v372 = vmul.f32 %v368, %v370
        %v373 = vmul.f32 %v368, %v371
        %v374 = vadd.f32 %v364, %v372
        %v375 = vadd.f32 %v365, %v373
        %376 = vset.pattern.permute.xlu0 2
        %377 = vperm.xlu0 %376, %v356
        %v378 = vpop.permute.xlu0 %377
        %v380 = vperm.slane %v268, 2
        %v381 = vperm.slane %v269, 2
        %v382 = vmul.f32 %v378, %v380
        %v383 = vmul.f32 %v378, %v381
        %v384 = vadd.f32 %v374, %v382
        %v385 = vadd.f32 %v375, %v383
        %386 = vset.pattern.permute.xlu0 3
        %387 = vperm.xlu0 %386, %v356
        %v388 = vpop.permute.xlu0 %387
        %v390 = vperm.slane %v268, 3
        %v391 = vperm.slane %v269, 3
        %v392 = vmul.f32 %v388, %v390
        %v393 = vmul.f32 %v388, %v391
        %v394 = vadd.f32 %v384, %v392
        %v395 = vadd.f32 %v385, %v393
        %v396 = vadd.f32 %v353, %v394
        %v397 = vadd.f32 %v354, %v395
        %398 = vst [vmem:[#allocation1] ss:$2 sm:$0xff] %v204
        %v399 = vld.sshfl [vmem:[#allocation1 + $0x8] sm:$0xff pattern:$0x75316420]
        %400 = vrot.lane.b32.xlu0 %v399, 16
        %v401 = vpop.permute.xlu0 %400
        %403 = vst [vmem:[#allocation1] ss:$2 sm:$0xff] %v204
        %v404 = vld.sshfl [vmem:[#allocation1] sm:$0xff pattern:$0x75316420]
        %v405 = vld.sshfl [vmem:[#allocation1 + $0x8] sm:$0xff pattern:$0x75316420]
        %406 = vrot.lane.b32.xlu0 %v404, 16
        %v407 = vpop.permute.xlu0 %406
        %408 = vrot.lane.b32.xlu0 %v405, 16
        %v409 = vpop.permute.xlu0 %408
        %v410 = vsel %vm251, %v407, %v409
        %v413 = vsel %vm251, %v401, %v407
        %414 = vst [vmem:[#allocation1] ss:$2 sm:$0xff] %v204
        %v415 = vld.sshfl [vmem:[#allocation1] sm:$0xff pattern:$0x75316420]
        %v416 = vld.sshfl [vmem:[#allocation1 + $0x8] sm:$0xff pattern:$0x75316420]
        %417 = vrot.lane.b32.xlu0 %v415, 112
        %v418 = vpop.permute.xlu0 %417
        %419 = vrot.lane.b32.xlu0 %v416, 112
        %v420 = vpop.permute.xlu0 %419
        %v421 = vsel %vm260, %v418, %v420
        %424 = vst [vmem:[#allocation1] ss:$2 sm:$0xff] %v204
        %v425 = vld.sshfl [vmem:[#allocation1] sm:$0xff pattern:$0x75316420]
        %426 = vrot.lane.b32.xlu0 %v425, 112
        %v427 = vpop.permute.xlu0 %426
        %v429 = vsel %vm260, %v420, %v427
        %v430 = vsel %vm200, %v421, %v413
        %v431 = vsel %vm201, %v429, %v410
        %v432 = vsel %vm202, %v413, %v421
        %v433 = vsel %vm203, %v410, %v429
        %s434 = scalar_lea.vmem %s1, 4
        %v435 = vld [vmem:[%s434] sm:$0xf]
        %437 = vset.pattern.permute.xlu0 0
        %438 = vperm.xlu0 %437, %v435
        %v439 = vpop.permute.xlu0 %438
        %v441 = vperm.slane %v430, 0
        %v442 = vperm.slane %v431, 0
        %v443 = vmul.f32 %v439, %v441
        %v444 = vmul.f32 %v439, %v442
        %445 = vset.pattern.permute.xlu0 1
        %446 = vperm.xlu0 %445, %v435
        %v447 = vpop.permute.xlu0 %446
        %v449 = vperm.slane %v430, 1
        %v450 = vperm.slane %v431, 1
        %v451 = vmul.f32 %v447, %v449
        %v452 = vmul.f32 %v447, %v450
        %v453 = vadd.f32 %v443, %v451
        %v454 = vadd.f32 %v444, %v452
        %455 = vset.pattern.permute.xlu0 2
        %456 = vperm.xlu0 %455, %v435
        %v457 = vpop.permute.xlu0 %456
        %v459 = vperm.slane %v430, 2
        %v460 = vperm.slane %v431, 2
        %v461 = vmul.f32 %v457, %v459
        %v462 = vmul.f32 %v457, %v460
        %v463 = vadd.f32 %v453, %v461
        %v464 = vadd.f32 %v454, %v462
        %465 = vset.pattern.permute.xlu0 3
        %466 = vperm.xlu0 %465, %v435
        %v467 = vpop.permute.xlu0 %466
        %v469 = vperm.slane %v430, 3
        %v470 = vperm.slane %v431, 3
        %v471 = vmul.f32 %v467, %v469
        %v472 = vmul.f32 %v467, %v470
        %v473 = vadd.f32 %v463, %v471
        %v474 = vadd.f32 %v464, %v472
        %v475 = vadd.f32 %v396, %v473
        %v476 = vadd.f32 %v397, %v474
        %s477 = scalar_lea.vmem %s1, 16
        %v478 = vld [vmem:[%s477] sm:$0xf]
        %480 = vset.pattern.permute.xlu0 0
        %481 = vperm.xlu0 %480, %v478
        %v482 = vpop.permute.xlu0 %481
        %v484 = vperm.slane %v204, 0
        %v485 = vperm.slane %v204, 4
        %v488 = vperm.slane %v484, 0
        %v489 = vperm.slane %v485, 0
        %v490 = vmul.f32 %v482, %v488
        %v491 = vmul.f32 %v482, %v489
        %492 = vset.pattern.permute.xlu0 1
        %493 = vperm.xlu0 %492, %v478
        %v494 = vpop.permute.xlu0 %493
        %v496 = vperm.slane %v204, 1
        %v497 = vperm.slane %v204, 5
        %v500 = vperm.slane %v496, 1
        %v501 = vperm.slane %v497, 1
        %v502 = vmul.f32 %v494, %v500
        %v503 = vmul.f32 %v494, %v501
        %v504 = vadd.f32 %v490, %v502
        %v505 = vadd.f32 %v491, %v503
        %506 = vset.pattern.permute.xlu0 2
        %507 = vperm.xlu0 %506, %v478
        %v508 = vpop.permute.xlu0 %507
        %v510 = vperm.slane %v204, 2
        %v511 = vperm.slane %v204, 6
        %v514 = vperm.slane %v510, 2
        %v515 = vperm.slane %v511, 2
        %v516 = vmul.f32 %v508, %v514
        %v517 = vmul.f32 %v508, %v515
        %v518 = vadd.f32 %v504, %v516
        %v519 = vadd.f32 %v505, %v517
        %520 = vset.pattern.permute.xlu0 3
        %521 = vperm.xlu0 %520, %v478
        %v522 = vpop.permute.xlu0 %521
        %v524 = vperm.slane %v204, 3
        %v525 = vperm.slane %v204, 7
        %v528 = vperm.slane %v524, 3
        %v529 = vperm.slane %v525, 3
        %v530 = vmul.f32 %v522, %v528
        %v531 = vmul.f32 %v522, %v529
        %v532 = vadd.f32 %v518, %v530
        %v533 = vadd.f32 %v519, %v531
        %v534 = vadd.f32 %v475, %v532
        %v535 = vadd.f32 %v476, %v533
        %s536 = scalar_lea.vmem %s1, 28
        %v537 = vld [vmem:[%s536] sm:$0xf]
        %539 = vset.pattern.permute.xlu0 0
        %540 = vperm.xlu0 %539, %v537
        %v541 = vpop.permute.xlu0 %540
        %v543 = vperm.slane %v432, 0
        %v544 = vperm.slane %v433, 0
        %v545 = vmul.f32 %v541, %v543
        %v546 = vmul.f32 %v541, %v544
        %547 = vset.pattern.permute.xlu0 1
        %548 = vperm.xlu0 %547, %v537
        %v549 = vpop.permute.xlu0 %548
        %v551 = vperm.slane %v432, 1
        %v552 = vperm.slane %v433, 1
        %v553 = vmul.f32 %v549, %v551
        %v554 = vmul.f32 %v549, %v552
        %v555 = vadd.f32 %v545, %v553
        %v556 = vadd.f32 %v546, %v554
        %557 = vset.pattern.permute.xlu0 2
        %558 = vperm.xlu0 %557, %v537
        %v559 = vpop.permute.xlu0 %558
        %v561 = vperm.slane %v432, 2
        %v562 = vperm.slane %v433, 2
        %v563 = vmul.f32 %v559, %v561
        %v564 = vmul.f32 %v559, %v562
        %v565 = vadd.f32 %v555, %v563
        %v566 = vadd.f32 %v556, %v564
        %567 = vset.pattern.permute.xlu0 3
        %568 = vperm.xlu0 %567, %v537
        %v569 = vpop.permute.xlu0 %568
        %v571 = vperm.slane %v432, 3
        %v572 = vperm.slane %v433, 3
        %v573 = vmul.f32 %v569, %v571
        %v574 = vmul.f32 %v569, %v572
        %v575 = vadd.f32 %v565, %v573
        %v576 = vadd.f32 %v566, %v574
        %v577 = vadd.f32 %v534, %v575
        %v578 = vadd.f32 %v535, %v576
        %580 = vrot.lane.b32.xlu0 %v243, 16
        %v581 = vpop.permute.xlu0 %580
        %584 = vrot.lane.b32.xlu0 %v242, 16
        %v585 = vpop.permute.xlu0 %584
        %v586 = vsel %vm251, %v585, %v581
        %v589 = vsel %vm251, %v581, %v585
        %590 = vrot.lane.b32.xlu0 %v242, 112
        %v591 = vpop.permute.xlu0 %590
        %592 = vrot.lane.b32.xlu0 %v243, 112
        %v593 = vpop.permute.xlu0 %592
        %v594 = vsel %vm260, %v591, %v593
        %v598 = vsel %vm260, %v593, %v591
        %v599 = vsel %vm200, %v594, %v589
        %v600 = vsel %vm201, %v598, %v586
        %v601 = vsel %vm202, %v589, %v594
        %v602 = vsel %vm203, %v586, %v598
        %s603 = scalar_lea.vmem %s1, 8
        %v604 = vld [vmem:[%s603] sm:$0xf]
        %606 = vset.pattern.permute.xlu0 0
        %607 = vperm.xlu0 %606, %v604
        %v608 = vpop.permute.xlu0 %607
        %v610 = vperm.slane %v599, 0
        %v611 = vperm.slane %v600, 0
        %v612 = vmul.f32 %v608, %v610
        %v613 = vmul.f32 %v608, %v611
        %614 = vset.pattern.permute.xlu0 1
        %615 = vperm.xlu0 %614, %v604
        %v616 = vpop.permute.xlu0 %615
        %v618 = vperm.slane %v599, 1
        %v619 = vperm.slane %v600, 1
        %v620 = vmul.f32 %v616, %v618
        %v621 = vmul.f32 %v616, %v619
        %v622 = vadd.f32 %v612, %v620
        %v623 = vadd.f32 %v613, %v621
        %624 = vset.pattern.permute.xlu0 2
        %625 = vperm.xlu0 %624, %v604
        %v626 = vpop.permute.xlu0 %625
        %v628 = vperm.slane %v599, 2
        %v629 = vperm.slane %v600, 2
        %v630 = vmul.f32 %v626, %v628
        %v631 = vmul.f32 %v626, %v629
        %v632 = vadd.f32 %v622, %v630
        %v633 = vadd.f32 %v623, %v631
        %634 = vset.pattern.permute.xlu0 3
        %635 = vperm.xlu0 %634, %v604
        %v636 = vpop.permute.xlu0 %635
        %v638 = vperm.slane %v599, 3
        %v639 = vperm.slane %v600, 3
        %v640 = vmul.f32 %v636, %v638
        %v641 = vmul.f32 %v636, %v639
        %v642 = vadd.f32 %v632, %v640
        %v643 = vadd.f32 %v633, %v641
        %v644 = vadd.f32 %v577, %v642
        %v645 = vadd.f32 %v578, %v643
        %s646 = scalar_lea.vmem %s1, 20
        %v647 = vld [vmem:[%s646] sm:$0xf]
        %649 = vset.pattern.permute.xlu0 0
        %650 = vperm.xlu0 %649, %v647
        %v651 = vpop.permute.xlu0 %650
        %v653 = vperm.slane %v242, 0
        %v654 = vperm.slane %v243, 0
        %v655 = vmul.f32 %v651, %v653
        %v656 = vmul.f32 %v651, %v654
        %657 = vset.pattern.permute.xlu0 1
        %658 = vperm.xlu0 %657, %v647
        %v659 = vpop.permute.xlu0 %658
        %v661 = vperm.slane %v242, 1
        %v662 = vperm.slane %v243, 1
        %v663 = vmul.f32 %v659, %v661
        %v664 = vmul.f32 %v659, %v662
        %v665 = vadd.f32 %v655, %v663
        %v666 = vadd.f32 %v656, %v664
        %667 = vset.pattern.permute.xlu0 2
        %668 = vperm.xlu0 %667, %v647
        %v669 = vpop.permute.xlu0 %668
        %v671 = vperm.slane %v242, 2
        %v672 = vperm.slane %v243, 2
        %v673 = vmul.f32 %v669, %v671
        %v674 = vmul.f32 %v669, %v672
        %v675 = vadd.f32 %v665, %v673
        %v676 = vadd.f32 %v666, %v674
        %677 = vset.pattern.permute.xlu0 3
        %678 = vperm.xlu0 %677, %v647
        %v679 = vpop.permute.xlu0 %678
        %v681 = vperm.slane %v242, 3
        %v682 = vperm.slane %v243, 3
        %v683 = vmul.f32 %v679, %v681
        %v684 = vmul.f32 %v679, %v682
        %v685 = vadd.f32 %v675, %v683
        %v686 = vadd.f32 %v676, %v684
        %v687 = vadd.f32 %v644, %v685
        %v688 = vadd.f32 %v645, %v686
        %s689 = scalar_lea.vmem %s1, 32
        %v690 = vld [vmem:[%s689] sm:$0xf]
        %692 = vset.pattern.permute.xlu0 0
        %693 = vperm.xlu0 %692, %v690
        %v694 = vpop.permute.xlu0 %693
        %v696 = vperm.slane %v601, 0
        %v697 = vperm.slane %v602, 0
        %v698 = vmul.f32 %v694, %v696
        %v699 = vmul.f32 %v694, %v697
        %700 = vset.pattern.permute.xlu0 1
        %701 = vperm.xlu0 %700, %v690
        %v702 = vpop.permute.xlu0 %701
        %v704 = vperm.slane %v601, 1
        %v705 = vperm.slane %v602, 1
        %v706 = vmul.f32 %v702, %v704
        %v707 = vmul.f32 %v702, %v705
        %v708 = vadd.f32 %v698, %v706
        %v709 = vadd.f32 %v699, %v707
        %710 = vset.pattern.permute.xlu0 2
        %711 = vperm.xlu0 %710, %v690
        %v712 = vpop.permute.xlu0 %711
        %v714 = vperm.slane %v601, 2
        %v715 = vperm.slane %v602, 2
        %v716 = vmul.f32 %v712, %v714
        %v717 = vmul.f32 %v712, %v715
        %v718 = vadd.f32 %v708, %v716
        %v719 = vadd.f32 %v709, %v717
        %720 = vset.pattern.permute.xlu0 3
        %721 = vperm.xlu0 %720, %v690
        %v722 = vpop.permute.xlu0 %721
        %v724 = vperm.slane %v601, 3
        %v725 = vperm.slane %v602, 3
        %v726 = vmul.f32 %v722, %v724
        %v727 = vmul.f32 %v722, %v725
        %v728 = vadd.f32 %v718, %v726
        %v729 = vadd.f32 %v719, %v727
        %v730 = vadd.f32 %v687, %v728
        %v731 = vadd.f32 %v688, %v729
        %vm732 = vcmask 1043456
        %v733 = vsel %vm732, %v730, 0.0
        %v734 = vsel %vm732, %v731, 0.0
        %v735 = vadd.f32 %v733, %v734
        %736 = vadd.xlane.f32.xlu0 %v735
        %v737 = vpop.xlane.xlu0 %736
        %v738 = vrcp.pop 256.0
        %v739 = vmul.f32 256.0, %v738
        %v740 = vsub.f32 1.0, %v739
        %v741 = vmul.f32 %v738, %v740
        %v742 = vadd.f32 %v738, %v741
        %vm743 = vweird.f32 %v738
        %v744 = vsel %vm743, %v738, %v742
        %v745 = vmul.f32 %v737, %v744
        %v746 = vsub.f32 %v730, %v745
        %v747 = vsub.f32 %v731, %v745
        %v748 = vmul.f32 %v746, %v746
        %v749 = vmul.f32 %v747, %v747
        %v750 = vsel %vm732, %v748, 0.0
        %v751 = vsel %vm732, %v749, 0.0
        %v752 = vadd.f32 %v750, %v751
        %753 = vadd.xlane.f32.xlu0 %v752
        %v754 = vpop.xlane.xlu0 %753
        %v755 = vmul.f32 %v754, %v744
        %v756 = vadd.f32 %v755, 1e-05
        %v757 = vrsqrt.pop %v756
        %v758 = vmul.f32 %v757, %v756
        %v759 = vmul.f32 %v758, %v757
        %v760 = vmul.f32 0.5, %v759
        %v761 = vsub.f32 1.5, %v760
        %v762 = vmul.f32 %v757, %v761
        %vm763 = vweird.f32 %v756
        %vm764 = vweird.f32 %v757
        %vm765 = vmor %vm763, %vm764
        %v766 = vsel %vm765, %v757, %v762
        %v767 = vmul.f32 %v746, %v766
        %v768 = vmul.f32 %v747, %v766
        %v769 = vmax.f32 %v767, 0.0
        %v770 = vmax.f32 %v768, 0.0
        %773 = vrot.lane.b32.xlu0 %v769, 127
        %v774 = vpop.permute.xlu0 %773
        %775 = vrot.lane.b32.xlu0 %v770, 127
        %v776 = vpop.permute.xlu0 %775
        %v777 = vsel %vm213, %v774, %v776
        %v781 = vsel %vm213, %v776, %v774
        %782 = vrot.lane.b32.xlu0 %v770, 1
        %v783 = vpop.permute.xlu0 %782
        %785 = vrot.lane.b32.xlu0 %v769, 1
        %v786 = vpop.permute.xlu0 %785
        %v787 = vsel %vm235, %v786, %v783
        %v790 = vsel %vm235, %v783, %v786
        %v791 = vsel %vm196, %v777, %v790
        %v792 = vsel %vm197, %v781, %v787
        %v793 = vsel %vm198, %v790, %v777
        %v794 = vsel %vm199, %v787, %v781
        %796 = vrot.lane.b32.xlu0 %v792, 16
        %v797 = vpop.permute.xlu0 %796
        %800 = vrot.lane.b32.xlu0 %v791, 16
        %v801 = vpop.permute.xlu0 %800
        %v802 = vsel %vm251, %v801, %v797
        %v805 = vsel %vm251, %v797, %v801
        %806 = vrot.lane.b32.xlu0 %v791, 112
        %v807 = vpop.permute.xlu0 %806
        %808 = vrot.lane.b32.xlu0 %v792, 112
        %v809 = vpop.permute.xlu0 %808
        %v810 = vsel %vm260, %v807, %v809
        %v814 = vsel %vm260, %v809, %v807
        %v815 = vsel %vm200, %v810, %v805
        %v816 = vsel %vm201, %v814, %v802
        %v817 = vsel %vm202, %v805, %v810
        %v818 = vsel %vm203, %v802, %v814
        %v819 = vld [vmem:[%s2] sm:$0xf]
        %821 = vset.pattern.permute.xlu0 0
        %822 = vperm.xlu0 %821, %v819
        %v823 = vpop.permute.xlu0 %822
        %v825 = vperm.slane %v815, 0
        %v826 = vperm.slane %v816, 0
        %v827 = vmul.f32 %v823, %v825
        %v828 = vmul.f32 %v823, %v826
        %829 = vset.pattern.permute.xlu0 1
        %830 = vperm.xlu0 %829, %v819
        %v831 = vpop.permute.xlu0 %830
        %v833 = vperm.slane %v815, 1
        %v834 = vperm.slane %v816, 1
        %v835 = vmul.f32 %v831, %v833
        %v836 = vmul.f32 %v831, %v834
        %v837 = vadd.f32 %v827, %v835
        %v838 = vadd.f32 %v828, %v836
        %839 = vset.pattern.permute.xlu0 2
        %840 = vperm.xlu0 %839, %v819
        %v841 = vpop.permute.xlu0 %840
        %v843 = vperm.slane %v815, 2
        %v844 = vperm.slane %v816, 2
        %v845 = vmul.f32 %v841, %v843
        %v846 = vmul.f32 %v841, %v844
        %v847 = vadd.f32 %v837, %v845
        %v848 = vadd.f32 %v838, %v846
        %849 = vset.pattern.permute.xlu0 3
        %850 = vperm.xlu0 %849, %v819
        %v851 = vpop.permute.xlu0 %850
        %v853 = vperm.slane %v815, 3
        %v854 = vperm.slane %v816, 3
        %v855 = vmul.f32 %v851, %v853
        %v856 = vmul.f32 %v851, %v854
        %v857 = vadd.f32 %v847, %v855
        %v858 = vadd.f32 %v848, %v856
        %v859 = vadd.f32 %v857, 0.0
        %v860 = vadd.f32 %v858, 0.0
        %s861 = scalar_lea.vmem %s2, 12
        %v862 = vld [vmem:[%s861] sm:$0xf]
        %864 = vset.pattern.permute.xlu0 0
        %865 = vperm.xlu0 %864, %v862
        %v866 = vpop.permute.xlu0 %865
        %v868 = vperm.slane %v791, 0
        %v869 = vperm.slane %v792, 0
        %v870 = vmul.f32 %v866, %v868
        %v871 = vmul.f32 %v866, %v869
        %872 = vset.pattern.permute.xlu0 1
        %873 = vperm.xlu0 %872, %v862
        %v874 = vpop.permute.xlu0 %873
        %v876 = vperm.slane %v791, 1
        %v877 = vperm.slane %v792, 1
        %v878 = vmul.f32 %v874, %v876
        %v879 = vmul.f32 %v874, %v877
        %v880 = vadd.f32 %v870, %v878
        %v881 = vadd.f32 %v871, %v879
        %882 = vset.pattern.permute.xlu0 2
        %883 = vperm.xlu0 %882, %v862
        %v884 = vpop.permute.xlu0 %883
        %v886 = vperm.slane %v791, 2
        %v887 = vperm.slane %v792, 2
        %v888 = vmul.f32 %v884, %v886
        %v889 = vmul.f32 %v884, %v887
        %v890 = vadd.f32 %v880, %v888
        %v891 = vadd.f32 %v881, %v889
        %892 = vset.pattern.permute.xlu0 3
        %893 = vperm.xlu0 %892, %v862
        %v894 = vpop.permute.xlu0 %893
        %v896 = vperm.slane %v791, 3
        %v897 = vperm.slane %v792, 3
        %v898 = vmul.f32 %v894, %v896
        %v899 = vmul.f32 %v894, %v897
        %v900 = vadd.f32 %v890, %v898
        %v901 = vadd.f32 %v891, %v899
        %v902 = vadd.f32 %v859, %v900
        %v903 = vadd.f32 %v860, %v901
        %s904 = scalar_lea.vmem %s2, 24
        %v905 = vld [vmem:[%s904] sm:$0xf]
        %907 = vset.pattern.permute.xlu0 0
        %908 = vperm.xlu0 %907, %v905
        %v909 = vpop.permute.xlu0 %908
        %v911 = vperm.slane %v817, 0
        %v912 = vperm.slane %v818, 0
        %v913 = vmul.f32 %v909, %v911
        %v914 = vmul.f32 %v909, %v912
        %915 = vset.pattern.permute.xlu0 1
        %916 = vperm.xlu0 %915, %v905
        %v917 = vpop.permute.xlu0 %916
        %v919 = vperm.slane %v817, 1
        %v920 = vperm.slane %v818, 1
        %v921 = vmul.f32 %v917, %v919
        %v922 = vmul.f32 %v917, %v920
        %v923 = vadd.f32 %v913, %v921
        %v924 = vadd.f32 %v914, %v922
        %925 = vset.pattern.permute.xlu0 2
        %926 = vperm.xlu0 %925, %v905
        %v927 = vpop.permute.xlu0 %926
        %v929 = vperm.slane %v817, 2
        %v930 = vperm.slane %v818, 2
        %v931 = vmul.f32 %v927, %v929
        %v932 = vmul.f32 %v927, %v930
        %v933 = vadd.f32 %v923, %v931
        %v934 = vadd.f32 %v924, %v932
        %935 = vset.pattern.permute.xlu0 3
        %936 = vperm.xlu0 %935, %v905
        %v937 = vpop.permute.xlu0 %936
        %v939 = vperm.slane %v817, 3
        %v940 = vperm.slane %v818, 3
        %v941 = vmul.f32 %v937, %v939
        %v942 = vmul.f32 %v937, %v940
        %v943 = vadd.f32 %v933, %v941
        %v944 = vadd.f32 %v934, %v942
        %v945 = vadd.f32 %v902, %v943
        %v946 = vadd.f32 %v903, %v944
        %947 = vrot.lane.b32.xlu0 %v770, 16
        %v948 = vpop.permute.xlu0 %947
        %950 = vrot.lane.b32.xlu0 %v769, 16
        %v951 = vpop.permute.xlu0 %950
        %v952 = vsel %vm251, %v951, %v948
        %v955 = vsel %vm251, %v948, %v951
        %956 = vrot.lane.b32.xlu0 %v769, 112
        %v957 = vpop.permute.xlu0 %956
        %958 = vrot.lane.b32.xlu0 %v770, 112
        %v959 = vpop.permute.xlu0 %958
        %v960 = vsel %vm260, %v957, %v959
        %v964 = vsel %vm260, %v959, %v957
        %v965 = vsel %vm200, %v960, %v955
        %v966 = vsel %vm201, %v964, %v952
        %v967 = vsel %vm202, %v955, %v960
        %v968 = vsel %vm203, %v952, %v964
        %s969 = scalar_lea.vmem %s2, 4
        %v970 = vld [vmem:[%s969] sm:$0xf]
        %972 = vset.pattern.permute.xlu0 0
        %973 = vperm.xlu0 %972, %v970
        %v974 = vpop.permute.xlu0 %973
        %v976 = vperm.slane %v965, 0
        %v977 = vperm.slane %v966, 0
        %v978 = vmul.f32 %v974, %v976
        %v979 = vmul.f32 %v974, %v977
        %980 = vset.pattern.permute.xlu0 1
        %981 = vperm.xlu0 %980, %v970
        %v982 = vpop.permute.xlu0 %981
        %v984 = vperm.slane %v965, 1
        %v985 = vperm.slane %v966, 1
        %v986 = vmul.f32 %v982, %v984
        %v987 = vmul.f32 %v982, %v985
        %v988 = vadd.f32 %v978, %v986
        %v989 = vadd.f32 %v979, %v987
        %990 = vset.pattern.permute.xlu0 2
        %991 = vperm.xlu0 %990, %v970
        %v992 = vpop.permute.xlu0 %991
        %v994 = vperm.slane %v965, 2
        %v995 = vperm.slane %v966, 2
        %v996 = vmul.f32 %v992, %v994
        %v997 = vmul.f32 %v992, %v995
        %v998 = vadd.f32 %v988, %v996
        %v999 = vadd.f32 %v989, %v997
        %1000 = vset.pattern.permute.xlu0 3
        %1001 = vperm.xlu0 %1000, %v970
        %v1002 = vpop.permute.xlu0 %1001
        %v1004 = vperm.slane %v965, 3
        %v1005 = vperm.slane %v966, 3
        %v1006 = vmul.f32 %v1002, %v1004
        %v1007 = vmul.f32 %v1002, %v1005
        %v1008 = vadd.f32 %v998, %v1006
        %v1009 = vadd.f32 %v999, %v1007
        %v1010 = vadd.f32 %v945, %v1008
        %v1011 = vadd.f32 %v946, %v1009
        %s1012 = scalar_lea.vmem %s2, 16
        %v1013 = vld [vmem:[%s1012] sm:$0xf]
        %1015 = vset.pattern.permute.xlu0 0
        %1016 = vperm.xlu0 %1015, %v1013
        %v1017 = vpop.permute.xlu0 %1016
        %v1019 = vperm.slane %v769, 0
        %v1020 = vperm.slane %v770, 0
        %v1021 = vmul.f32 %v1017, %v1019
        %v1022 = vmul.f32 %v1017, %v1020
        %1023 = vset.pattern.permute.xlu0 1
        %1024 = vperm.xlu0 %1023, %v1013
        %v1025 = vpop.permute.xlu0 %1024
        %v1027 = vperm.slane %v769, 1
        %v1028 = vperm.slane %v770, 1
        %v1029 = vmul.f32 %v1025, %v1027
        %v1030 = vmul.f32 %v1025, %v1028
        %v1031 = vadd.f32 %v1021, %v1029
        %v1032 = vadd.f32 %v1022, %v1030
        %1033 = vset.pattern.permute.xlu0 2
        %1034 = vperm.xlu0 %1033, %v1013
        %v1035 = vpop.permute.xlu0 %1034
        %v1037 = vperm.slane %v769, 2
        %v1038 = vperm.slane %v770, 2
        %v1039 = vmul.f32 %v1035, %v1037
        %v1040 = vmul.f32 %v1035, %v1038
        %v1041 = vadd.f32 %v1031, %v1039
        %v1042 = vadd.f32 %v1032, %v1040
        %1043 = vset.pattern.permute.xlu0 3
        %1044 = vperm.xlu0 %1043, %v1013
        %v1045 = vpop.permute.xlu0 %1044
        %v1047 = vperm.slane %v769, 3
        %v1048 = vperm.slane %v770, 3
        %v1049 = vmul.f32 %v1045, %v1047
        %v1050 = vmul.f32 %v1045, %v1048
        %v1051 = vadd.f32 %v1041, %v1049
        %v1052 = vadd.f32 %v1042, %v1050
        %v1053 = vadd.f32 %v1010, %v1051
        %v1054 = vadd.f32 %v1011, %v1052
        %s1055 = scalar_lea.vmem %s2, 28
        %v1056 = vld [vmem:[%s1055] sm:$0xf]
        %1058 = vset.pattern.permute.xlu0 0
        %1059 = vperm.xlu0 %1058, %v1056
        %v1060 = vpop.permute.xlu0 %1059
        %v1062 = vperm.slane %v967, 0
        %v1063 = vperm.slane %v968, 0
        %v1064 = vmul.f32 %v1060, %v1062
        %v1065 = vmul.f32 %v1060, %v1063
        %1066 = vset.pattern.permute.xlu0 1
        %1067 = vperm.xlu0 %1066, %v1056
        %v1068 = vpop.permute.xlu0 %1067
        %v1070 = vperm.slane %v967, 1
        %v1071 = vperm.slane %v968, 1
        %v1072 = vmul.f32 %v1068, %v1070
        %v1073 = vmul.f32 %v1068, %v1071
        %v1074 = vadd.f32 %v1064, %v1072
        %v1075 = vadd.f32 %v1065, %v1073
        %1076 = vset.pattern.permute.xlu0 2
        %1077 = vperm.xlu0 %1076, %v1056
        %v1078 = vpop.permute.xlu0 %1077
        %v1080 = vperm.slane %v967, 2
        %v1081 = vperm.slane %v968, 2
        %v1082 = vmul.f32 %v1078, %v1080
        %v1083 = vmul.f32 %v1078, %v1081
        %v1084 = vadd.f32 %v1074, %v1082
        %v1085 = vadd.f32 %v1075, %v1083
        %1086 = vset.pattern.permute.xlu0 3
        %1087 = vperm.xlu0 %1086, %v1056
        %v1088 = vpop.permute.xlu0 %1087
        %v1090 = vperm.slane %v967, 3
        %v1091 = vperm.slane %v968, 3
        %v1092 = vmul.f32 %v1088, %v1090
        %v1093 = vmul.f32 %v1088, %v1091
        %v1094 = vadd.f32 %v1084, %v1092
        %v1095 = vadd.f32 %v1085, %v1093
        %v1096 = vadd.f32 %v1053, %v1094
        %v1097 = vadd.f32 %v1054, %v1095
        %1099 = vrot.lane.b32.xlu0 %v794, 16
        %v1100 = vpop.permute.xlu0 %1099
        %1103 = vrot.lane.b32.xlu0 %v793, 16
        %v1104 = vpop.permute.xlu0 %1103
        %v1105 = vsel %vm251, %v1104, %v1100
        %v1108 = vsel %vm251, %v1100, %v1104
        %1109 = vrot.lane.b32.xlu0 %v793, 112
        %v1110 = vpop.permute.xlu0 %1109
        %1111 = vrot.lane.b32.xlu0 %v794, 112
        %v1112 = vpop.permute.xlu0 %1111
        %v1113 = vsel %vm260, %v1110, %v1112
        %v1117 = vsel %vm260, %v1112, %v1110
        %v1118 = vsel %vm200, %v1113, %v1108
        %v1119 = vsel %vm201, %v1117, %v1105
        %v1120 = vsel %vm202, %v1108, %v1113
        %v1121 = vsel %vm203, %v1105, %v1117
        %s1122 = scalar_lea.vmem %s2, 8
        %v1123 = vld [vmem:[%s1122] sm:$0xf]
        %1125 = vset.pattern.permute.xlu0 0
        %1126 = vperm.xlu0 %1125, %v1123
        %v1127 = vpop.permute.xlu0 %1126
        %v1129 = vperm.slane %v1118, 0
        %v1130 = vperm.slane %v1119, 0
        %v1131 = vmul.f32 %v1127, %v1129
        %v1132 = vmul.f32 %v1127, %v1130
        %1133 = vset.pattern.permute.xlu0 1
        %1134 = vperm.xlu0 %1133, %v1123
        %v1135 = vpop.permute.xlu0 %1134
        %v1137 = vperm.slane %v1118, 1
        %v1138 = vperm.slane %v1119, 1
        %v1139 = vmul.f32 %v1135, %v1137
        %v1140 = vmul.f32 %v1135, %v1138
        %v1141 = vadd.f32 %v1131, %v1139
        %v1142 = vadd.f32 %v1132, %v1140
        %1143 = vset.pattern.permute.xlu0 2
        %1144 = vperm.xlu0 %1143, %v1123
        %v1145 = vpop.permute.xlu0 %1144
        %v1147 = vperm.slane %v1118, 2
        %v1148 = vperm.slane %v1119, 2
        %v1149 = vmul.f32 %v1145, %v1147
        %v1150 = vmul.f32 %v1145, %v1148
        %v1151 = vadd.f32 %v1141, %v1149
        %v1152 = vadd.f32 %v1142, %v1150
        %1153 = vset.pattern.permute.xlu0 3
        %1154 = vperm.xlu0 %1153, %v1123
        %v1155 = vpop.permute.xlu0 %1154
        %v1157 = vperm.slane %v1118, 3
        %v1158 = vperm.slane %v1119, 3
        %v1159 = vmul.f32 %v1155, %v1157
        %v1160 = vmul.f32 %v1155, %v1158
        %v1161 = vadd.f32 %v1151, %v1159
        %v1162 = vadd.f32 %v1152, %v1160
        %v1163 = vadd.f32 %v1096, %v1161
        %v1164 = vadd.f32 %v1097, %v1162
        %s1165 = scalar_lea.vmem %s2, 20
        %v1166 = vld [vmem:[%s1165] sm:$0xf]
        %1168 = vset.pattern.permute.xlu0 0
        %1169 = vperm.xlu0 %1168, %v1166
        %v1170 = vpop.permute.xlu0 %1169
        %v1172 = vperm.slane %v793, 0
        %v1173 = vperm.slane %v794, 0
        %v1174 = vmul.f32 %v1170, %v1172
        %v1175 = vmul.f32 %v1170, %v1173
        %1176 = vset.pattern.permute.xlu0 1
        %1177 = vperm.xlu0 %1176, %v1166
        %v1178 = vpop.permute.xlu0 %1177
        %v1180 = vperm.slane %v793, 1
        %v1181 = vperm.slane %v794, 1
        %v1182 = vmul.f32 %v1178, %v1180
        %v1183 = vmul.f32 %v1178, %v1181
        %v1184 = vadd.f32 %v1174, %v1182
        %v1185 = vadd.f32 %v1175, %v1183
        %1186 = vset.pattern.permute.xlu0 2
        %1187 = vperm.xlu0 %1186, %v1166
        %v1188 = vpop.permute.xlu0 %1187
        %v1190 = vperm.slane %v793, 2
        %v1191 = vperm.slane %v794, 2
        %v1192 = vmul.f32 %v1188, %v1190
        %v1193 = vmul.f32 %v1188, %v1191
        %v1194 = vadd.f32 %v1184, %v1192
        %v1195 = vadd.f32 %v1185, %v1193
        %1196 = vset.pattern.permute.xlu0 3
        %1197 = vperm.xlu0 %1196, %v1166
        %v1198 = vpop.permute.xlu0 %1197
        %v1200 = vperm.slane %v793, 3
        %v1201 = vperm.slane %v794, 3
        %v1202 = vmul.f32 %v1198, %v1200
        %v1203 = vmul.f32 %v1198, %v1201
        %v1204 = vadd.f32 %v1194, %v1202
        %v1205 = vadd.f32 %v1195, %v1203
        %v1206 = vadd.f32 %v1163, %v1204
        %v1207 = vadd.f32 %v1164, %v1205
        %s1208 = scalar_lea.vmem %s2, 32
        %v1209 = vld [vmem:[%s1208] sm:$0xf]
        %1211 = vset.pattern.permute.xlu0 0
        %1212 = vperm.xlu0 %1211, %v1209
        %v1213 = vpop.permute.xlu0 %1212
        %v1215 = vperm.slane %v1120, 0
        %v1216 = vperm.slane %v1121, 0
        %v1217 = vmul.f32 %v1213, %v1215
        %v1218 = vmul.f32 %v1213, %v1216
        %1219 = vset.pattern.permute.xlu0 1
        %1220 = vperm.xlu0 %1219, %v1209
        %v1221 = vpop.permute.xlu0 %1220
        %v1223 = vperm.slane %v1120, 1
        %v1224 = vperm.slane %v1121, 1
        %v1225 = vmul.f32 %v1221, %v1223
        %v1226 = vmul.f32 %v1221, %v1224
        %v1227 = vadd.f32 %v1217, %v1225
        %v1228 = vadd.f32 %v1218, %v1226
        %1229 = vset.pattern.permute.xlu0 2
        %1230 = vperm.xlu0 %1229, %v1209
        %v1231 = vpop.permute.xlu0 %1230
        %v1233 = vperm.slane %v1120, 2
        %v1234 = vperm.slane %v1121, 2
        %v1235 = vmul.f32 %v1231, %v1233
        %v1236 = vmul.f32 %v1231, %v1234
        %v1237 = vadd.f32 %v1227, %v1235
        %v1238 = vadd.f32 %v1228, %v1236
        %1239 = vset.pattern.permute.xlu0 3
        %1240 = vperm.xlu0 %1239, %v1209
        %v1241 = vpop.permute.xlu0 %1240
        %v1243 = vperm.slane %v1120, 3
        %v1244 = vperm.slane %v1121, 3
        %v1245 = vmul.f32 %v1241, %v1243
        %v1246 = vmul.f32 %v1241, %v1244
        %v1247 = vadd.f32 %v1237, %v1245
        %v1248 = vadd.f32 %v1238, %v1246
        %v1249 = vadd.f32 %v1206, %v1247
        %v1250 = vadd.f32 %v1207, %v1248
        %v1251 = vsel %vm732, %v1249, 0.0
        %v1252 = vsel %vm732, %v1250, 0.0
        %v1253 = vadd.f32 %v1251, %v1252
        %1254 = vadd.xlane.f32.xlu0 %v1253
        %v1255 = vpop.xlane.xlu0 %1254
        %v1256 = vmul.f32 %v1255, %v744
        %v1257 = vsub.f32 %v1249, %v1256
        %v1258 = vsub.f32 %v1250, %v1256
        %v1259 = vmul.f32 %v1257, %v1257
        %v1260 = vmul.f32 %v1258, %v1258
        %v1261 = vsel %vm732, %v1259, 0.0
        %v1262 = vsel %vm732, %v1260, 0.0
        %v1263 = vadd.f32 %v1261, %v1262
        %1264 = vadd.xlane.f32.xlu0 %v1263
        %v1265 = vpop.xlane.xlu0 %1264
        %v1266 = vmul.f32 %v1265, %v744
        %v1267 = vadd.f32 %v1266, 1e-05
        %v1268 = vrsqrt.pop %v1267
        %v1269 = vmul.f32 %v1268, %v1267
        %v1270 = vmul.f32 %v1269, %v1268
        %v1271 = vmul.f32 0.5, %v1270
        %v1272 = vsub.f32 1.5, %v1271
        %v1273 = vmul.f32 %v1268, %v1272
        %vm1274 = vweird.f32 %v1267
        %vm1275 = vweird.f32 %v1268
        %vm1276 = vmor %vm1274, %vm1275
        %v1277 = vsel %vm1276, %v1268, %v1273
        %v1278 = vmul.f32 %v1257, %v1277
        %v1279 = vmul.f32 %v1258, %v1277
        %v1282 = vrot.slane %v1279, 4
        %v1283 = vsel %vm732, %v1278, %v1282
        %v1285 = vadd.f32 %v204, %v1283
        %1286 = vst [vmem:[%s163] sm:$0xff] %v1285
        %s1287 = sand.u32 %s93, 1
        %s1288 = scalar_lea.sflag [#allocation3], %s1287
        %s1289 = sand.u32 %s93, 1
        %s1290 = smul.addr %s1289, 8
        %s1291 = scalar_lea.vmem [#allocation2], %s1290
        // Predicated region
        $region33: #{tpu_custom_call.1} parent=31 // pred_check
          %p1292 = pneg %p103
        $region34: #{tpu_custom_call.1} parent=31 // pred_check_branch
          %1294 = sbr.rel (%p1292) target = $region36
        $region35: #{tpu_custom_call.1} parent=31 // pred_region
          %1296 = vsyncadd %s1288, 0
          %s1297 = smul.addr %s17, 2
          %s1298 = smul.addr %s1297, 4
          %s1299 = scalar_lea.hbm %s3, %s1298
          %s1301 = sshll.u32 %s1291, 4
          %s1302 = int_to_ptr.vmem [resolvable:$true] %s1301
          %s1303 = sshll.u32 %s1299, 4
          %s1304 = int_to_ptr.hbm [resolvable:$true] %s1303
          %1306 = dma.vmem_to_hbm [thread:$0]  %s1302, 128, %s1304, %s1288
        $region36: #{tpu_custom_call.1} parent=31 // pred_fallthru
          _
      $region32: #{tpu_custom_call.1} parent=5 // pred_fallthru
        _
      %p1307 = scmp.le.s32.totalorder 2, %s12
      // Predicated region
      $region37: #{tpu_custom_call.1} parent=5 // pred_check
        %p1308 = pneg %p1307
      $region38: #{tpu_custom_call.1} parent=5 // pred_check_branch
        %1310 = sbr.rel (%p1308) target = $region40
      $region39: #{tpu_custom_call.1} parent=5 // pred_region
        %s1311 = ssub.s32 %s12, 2
        // Predicated region
        $region41: #{tpu_custom_call.1} parent=39 // pred_check
          %p1312 = pneg %p109
        $region42: #{tpu_custom_call.1} parent=39 // pred_check_branch
          %1314 = sbr.rel (%p1312) target = $region44
        $region43: #{tpu_custom_call.1} parent=39 // pred_region
          %s1315 = sand.u32 %s94, 1
          %s1316 = scalar_lea.sflag [#allocation3], %s1315
          %s1317 = sand.u32 %s94, 1
          %s1318 = smul.addr %s1317, 8
          %s1319 = scalar_lea.vmem [#allocation2], %s1318
          %1321 = dma.done %s1316, 128
        $region44: #{tpu_custom_call.1} parent=39 // pred_fallthru
          _
      $region40: #{tpu_custom_call.1} parent=5 // pred_fallthru
        _
    $region6: #{tpu_custom_call.1} parent=1 // loop_footer
      %s16 = sadd.s32 1, %s12
    $region7: #{tpu_custom_call.1} parent=1 // loop_footer_branch
      %11 = sbr.rel target = $region3
    $region8: #{tpu_custom_call.1} parent=1 // loop_exit
      _
    %1322 = vsyncpa [#allocation3], 1
    %s1323 = scalar_lea.sflag [#allocation3], 1
    %1324 = vsyncpa %s1323, 1

</llo_original>
